<compile_context>
chip_gen: v5e
topology: v5e:2x2
jax: 0.10.0
libtpu: 0.0.40
codegen_flags: <defaults>
</compile_context>

<pallas_src>
import jax
import jax.numpy as jnp
from jax import lax
from jax.experimental import pallas as pl
from jax.experimental.pallas import tpu as pltpu

PAD_ID = 0  # constants.PAD_ID stand-in
# TODO(synk): PAD_ID tokens are NOT masked (they contribute emb[PAD_ID] and are
# counted in bow) -- this matches the reference torch code, which does the same.

_VMEM_TABLE_LIMIT_BYTES = 16 << 20   # conservative fast-path threshold
                                     # (fits all of v5e/v6e/v7x VMEM budgets)


def _round_up(x, m):
    return ((x + m - 1) // m) * m


# ----------------------------------------------------------------------------
# Kernel 1a: embedding gather, table resident in VMEM (small/medium vocab)
# ----------------------------------------------------------------------------
def _embs_vmem_gather_kernel(ids_ref, w_ref, emb_ref, out_ref, gbuf):
    """out[b] = sum_s w[b, s] * emb[ids[b, s]] for one batch tile.

    emb_ref is the whole table in VMEM.  Rows for all b_tile batch rows of a
    token position are staged into gbuf so the weighted accumulate runs on a
    full-sublane (b_tile, E) tile.
    """
    i = pl.program_id(0)
    b_tile, seq_len = w_ref.shape
    b0 = i * b_tile

    w = w_ref[...]                                    # (b_tile, S)
    acc = jnp.zeros(out_ref.shape, jnp.float32)       # lives in vregs
    # TODO(synk): for large static S switch to lax.fori_loop(..., unroll=4/8)
    # and an MXU dot (w_tile @ gathered_rows) instead of the unrolled VPU adds.
    for s in range(seq_len):
        for bl in range(b_tile):
            gbuf[pl.ds(bl, 1), :] = emb_ref[pl.ds(ids_ref[b0 + bl, s], 1), :]
        acc = acc + gbuf[...].astype(jnp.float32) * w[:, s:s + 1]
    out_ref[...] = acc


# ----------------------------------------------------------------------------
# Kernel 1b: embedding gather, table in HBM with manual DMA pipeline
# ----------------------------------------------------------------------------
def _embs_hbm_gather_kernel(ids_ref, w_ref, emb_hbm, out_ref, buf, sem):
    """Same math as above; emb stays in HBM and rows are gathered with
    manually pipelined DMAs: groups of b_tile row copies, NBUF groups deep.
    start()/wait() are paired on the SAME descriptor objects."""
    i = pl.program_id(0)
    b_tile, seq_len = w_ref.shape
    nbuf = buf.shape[0]
    b0 = i * b_tile

    def fetch(s, slot):
        cps = []
        for bl in range(b_tile):
            cp = pltpu.make_async_copy(
                emb_hbm.at[pl.ds(ids_ref[b0 + bl, s], 1), :],   # (1, E) row
                buf.at[slot, pl.ds(bl, 1), :],
                sem.at[slot, bl])
            cp.start()
            cps.append(cp)
        return cps

    # Prime nbuf-1 token groups so several groups of DMAs are always in flight.
    pending = {}
    for s0 in range(min(nbuf - 1, seq_len)):
        pending[s0 % nbuf] = fetch(s0, s0 % nbuf)

    w = w_ref[...]                                    # (b_tile, S)
    acc = jnp.zeros(out_ref.shape, jnp.float32)
    # TODO(synk): for large static S switch to lax.fori_loop(..., unroll=4/8)
    # and an MXU dot instead of the unrolled VPU adds.
    for s in range(seq_len):
        slot = s % nbuf
        nxt = s + nbuf - 1
        if nxt < seq_len:
            # Target slot ((s-1) % nbuf) was fully consumed at step s-1.
            pending[nxt % nbuf] = fetch(nxt, nxt % nbuf)
        for cp in pending.pop(slot):
            cp.wait()
        acc = acc + buf[slot].astype(jnp.float32) * w[:, s:s + 1]
    out_ref[...] = acc


# ----------------------------------------------------------------------------
# Kernel 2: bag-of-words counts, (batch tile, vocab tile) grid
# ----------------------------------------------------------------------------
def _bow_kernel(ids_ref, out_ref):
    """bow[b, v] = #{ s : ids[b, s] == v }  for this (batch, vocab) tile."""
    # TODO(synk): make_bow_matrix source not provided; occurrence counts
    # (float32) assumed rather than binary indicators.
    vt = pl.program_id(1)
    Bt, S = ids_ref.shape
    Vt = out_ref.shape[-1]
    base = vt * Vt
    iota_v = base + lax.broadcasted_iota(jnp.int32, (Bt, Vt), 1)   # (Bt, Vt)

    ids = ids_ref[...]                                             # (Bt, S)
    acc = jnp.zeros((Bt, Vt), jnp.float32)
    for s in range(S):                       # compare + convert-add (no select)
        acc = acc + (ids[:, s:s + 1] == iota_v).astype(jnp.float32)
    out_ref[...] = acc


# ----------------------------------------------------------------------------
# Wrapper
# ----------------------------------------------------------------------------
def make_message_pallas(top_word_ids, top_probas, emb_weight, message_type,
                        *, force_hbm_gather=False):
    """Pallas equivalent of Explainer.make_message.

    top_word_ids : (batch, seq) int      (already padded with PAD_ID)
    top_probas   : (batch, seq) float32
    emb_weight   : (vocab, emb_size) float  (the embedding layer's weight)
    """
    B, S = top_word_ids.shape
    V, E = emb_weight.shape
    ids = jnp.asarray(top_word_ids, jnp.int32)

    # -------------------------- bow path ------------------------------------
    if message_type == 'bow':
        B8 = _round_up(B, 8)                  # full-sublane batch
        b_tile = min(B8, 256)
        B_pad = _round_up(B8, b_tile)
        V128 = _round_up(V, 128)
        v_tile = min(2048, V128)              # big lane-dense vocab tiles
        V_pad = _round_up(V128, v_tile)

        ids_p = ids
        if B_pad != B:
            ids_p = jnp.pad(ids_p, ((0, B_pad - B), (0, 0)))

        bow = pl.pallas_call(
            _bow_kernel,
            out_shape=jax.ShapeDtypeStruct((B_pad, V_pad), jnp.float32),
            grid=(B_pad // b_tile, V_pad // v_tile),
            in_specs=[pl.BlockSpec((b_tile, S), lambda bi, vi: (bi, 0))],
            out_specs=pl.BlockSpec((b_tile, v_tile), lambda bi, vi: (bi, vi)),
            compiler_params=pltpu.CompilerParams(
                dimension_semantics=("parallel", "parallel")),
        )(ids_p)
        return bow[:B, :V]

    # -------------------------- embs paths ----------------------------------
    if message_type not in ('embs_sum', 'embs_mean',
                            'weighted_embs_sum', 'weighted_embs_mean'):
        raise Exception('Message type {} not implemented'.format(message_type))
    weighted = message_type.startswith('weighted')
    mean = message_type.endswith('mean')

    # Fold the weighting and the 1/S "mean" factor into one per-token scalar.
    if weighted:
        w = jnp.asarray(top_probas, jnp.float32)
    else:
        w = jnp.ones((B, S), jnp.float32)
    if mean:
        w = w / jnp.float32(S)

    emb = jnp.asarray(emb_weight)             # used at native (V, E) shape
    # Clamp ids (jnp.take-style) so a bad id can never drive an OOB read/DMA.
    ids_p = jnp.clip(ids, 0, V - 1)

    # Batch-tile to 8 rows per grid step (full sublanes, unmasked stores,
    # 8x fewer grid-step overheads, 8x more gather DMAs in flight).
    b_tile = 8
    B8 = _round_up(B, b_tile)
    if B8 != B:
        ids_p = jnp.pad(ids_p, ((0, B8 - B), (0, 0)))
        w = jnp.pad(w, ((0, B8 - B), (0, 0)))

    grid = (B8 // b_tile,)
    # NOTE(v7x): with tiny B this grid has a single step, leaving one of the
    # two TensorCores idle; for large E one could add a parallel E-tile axis.
    w_spec = pl.BlockSpec((b_tile, S), lambda i, ids_smem: (i, 0))
    out_spec = pl.BlockSpec((b_tile, E), lambda i, ids_smem: (i, 0))

    table_bytes = int(V) * int(E) * emb.dtype.itemsize
    use_vmem = (not force_hbm_gather) and table_bytes <= _VMEM_TABLE_LIMIT_BYTES

    if use_vmem:
        # Table fits in VMEM: auto-DMA it once, gather with VMEM slices.
        vmem_budget = 2 * table_bytes \
            + 4 * (b_tile * S * 4 + b_tile * E * 4) + (4 << 20)
        out = pl.pallas_call(
            _embs_vmem_gather_kernel,
            out_shape=jax.ShapeDtypeStruct((B8, E), jnp.float32),
            grid_spec=pltpu.PrefetchScalarGridSpec(
                num_scalar_prefetch=1,                         # ids -> SMEM
                grid=grid,
                in_specs=[w_spec,
                          pl.BlockSpec((V, E), lambda i, ids_smem: (0, 0))],
                out_specs=out_spec,
                scratch_shapes=[pltpu.VMEM((b_tile, E), emb.dtype)]),
            compiler_params=pltpu.CompilerParams(
                dimension_semantics=("parallel",),
                vmem_limit_bytes=max(vmem_budget, 32 << 20)),
        )(ids_p, w, emb)
    else:
        nbuf = max(2, min(4, S))                               # pipeline depth
        out = pl.pallas_call(
            _embs_hbm_gather_kernel,
            out_shape=jax.ShapeDtypeStruct((B8, E), jnp.float32),
            grid_spec=pltpu.PrefetchScalarGridSpec(
                num_scalar_prefetch=1,                         # ids -> SMEM
                grid=grid,
                in_specs=[w_spec,
                          pl.BlockSpec(memory_space=pl.ANY)],  # emb stays in HBM
                out_specs=out_spec,
                scratch_shapes=[
                    pltpu.VMEM((nbuf, b_tile, E), emb.dtype),  # gather buffers
                    pltpu.SemaphoreType.DMA((nbuf, b_tile)),
                ]),
            compiler_params=pltpu.CompilerParams(
                dimension_semantics=("parallel",)),
        )(ids_p, w, emb)
    return out[:B]


class ExplainerPallas:
    """JAX/Pallas port of Explainer (make_message + trivial loss)."""

    def __init__(self, vocab_size, emb_size, message_type='weighted_embs_sum'):
        self.words_vocab_size = vocab_size
        self.emb_size = emb_size
        self.message_type = message_type
        self._loss = None
        # nn.Parameter(torch.zeros(0))
        self.dumb_parameter = jnp.zeros((0,), dtype=jnp.float32)

    def get_output_size(self):
        if self.message_type == 'bow':
            return self.words_vocab_size
        return self.emb_size

    def loss(self, pred, gold):
        if self._loss is None:
            # torch.zeros(1, requires_grad=True).sum()
            return jnp.zeros((1,), jnp.float32).sum()
        raise NotImplementedError  # TODO(synk): build_loss is abstract in the spec

    def make_message(self, top_word_ids, top_probas, emb_weight):
        return make_message_pallas(top_word_ids, top_probas, emb_weight,
                                   self.message_type)


# ----------------------------------------------------------------------------
# Pure-JAX reference (mirrors the torch semantics) for verification
# ----------------------------------------------------------------------------
def _reference_message(ids, probas, emb, message_type):
    if message_type == 'bow':
        return jnp.sum(
            (ids[..., None] == jnp.arange(emb.shape[0])[None, None, :]),
            axis=1).astype(jnp.float32)
    embs = jnp.take(emb, ids, axis=0)                  # (B, S, E)
    if message_type.startswith('weighted'):
        embs = embs * probas[..., None]
    if message_type.endswith('mean'):
        return embs.mean(axis=1)
    return embs.sum(axis=1)


# ----------------------------------------------------------------------------
if __name__ == "__main__":
    batch, seq, vocab, emb_size = 2, 8, 128, 32

    key = jax.random.PRNGKey(0)
    k_ids, k_prob, k_emb = jax.random.split(key, 3)

    top_word_ids = jax.random.randint(k_ids, (batch, seq), 0, vocab,
                                      dtype=jnp.int32)
    top_probas = jax.nn.softmax(
        jax.random.normal(k_prob, (batch, seq), dtype=jnp.float32), axis=-1)
    emb_weight = jax.random.normal(k_emb, (vocab, emb_size), dtype=jnp.float32)

    ok = True
    for mtype in ('embs_sum', 'embs_mean', 'weighted_embs_sum',
                  'weighted_embs_mean', 'bow'):
        expl = ExplainerPallas(vocab, emb_size, message_type=mtype)
        out = expl.make_message(top_word_ids, top_probas, emb_weight)
        out = jax.block_until_ready(out)
        ref = _reference_message(top_word_ids, top_probas, emb_weight, mtype)
        if not jnp.allclose(out, ref, atol=1e-5, rtol=1e-5):
            ok = False
            print(f"MISMATCH for message_type={mtype}")

    # Also exercise the manual HBM-gather path (used for large vocab tables).
    out_hbm = make_message_pallas(top_word_ids, top_probas, emb_weight,
                                  'weighted_embs_sum', force_hbm_gather=True)
    out_hbm = jax.block_until_ready(out_hbm)
    ref_hbm = _reference_message(top_word_ids, top_probas, emb_weight,
                                 'weighted_embs_sum')
    if not jnp.allclose(out_hbm, ref_hbm, atol=1e-5, rtol=1e-5):
        ok = False
        print("MISMATCH for hbm-gather weighted_embs_sum")

    # loss() with _loss=None -> constant zero scalar, as in the reference.
    expl = ExplainerPallas(vocab, emb_size)
    loss_val = jax.block_until_ready(expl.loss(None, None))
    ok = ok and float(loss_val) == 0.0

    if ok:
        print("KERNEL_OK")
</pallas_src>

<mosaic_0001>
module attributes {stable_mosaic.version = 11 : i64} {
  func.func @_embs_vmem_gather_kernel(%arg0: i32, %arg1: memref<8x8xi32, #tpu.memory_space<smem>>, %arg2: memref<8x8xf32, #tpu.memory_space<vmem>>, %arg3: memref<128x32xf32, #tpu.memory_space<vmem>>, %arg4: memref<8x32xf32, #tpu.memory_space<vmem>>, %arg5: memref<8x32xf32, #tpu.memory_space<vmem>>) attributes {dimension_semantics = [#tpu.dimension_semantics<parallel>], iteration_bounds = array<i64: 1>, scalar_prefetch = 1 : i64, scratch_operands = 1 : i64, tpu.core_type = #tpu.core_type<tc>, window_params = [{transform_indices = @transform_0, window_bounds = array<i64: 8, 8>}, {pipeline_mode = #tpu.pipeline_mode<synchronous>, transform_indices = @transform_1, window_bounds = array<i64: 128, 32>}, {transform_indices = @transform_2, window_bounds = array<i64: 8, 32>}]} {
    %c8_i32 = arith.constant 8 : i32
    %0 = arith.muli %arg0, %c8_i32 : i32
    %c0 = arith.constant 0 : index
    %c0_0 = arith.constant 0 : index
    %1 = vector.load %arg2[%c0, %c0_0] : memref<8x8xf32, #tpu.memory_space<vmem>>, vector<8x8xf32>
    %cst = arith.constant 0.000000e+00 : f32
    %2 = vector.broadcast %cst : f32 to vector<8x32xf32>
    %c0_i32 = arith.constant 0 : i32
    %3 = arith.addi %0, %c0_i32 : i32
    %4 = arith.index_cast %3 : i32 to index
    %c0_1 = arith.constant 0 : index
    %5 = memref.load %arg1[%4, %c0_1] : memref<8x8xi32, #tpu.memory_space<smem>>
    %6 = arith.index_cast %5 : i32 to index
    %c0_2 = arith.constant 0 : index
    %7 = vector.load %arg3[%6, %c0_2] : memref<128x32xf32, #tpu.memory_space<vmem>>, vector<1x32xf32>
    %c0_3 = arith.constant 0 : index
    %c0_4 = arith.constant 0 : index
    %8 = vector.load %arg5[%c0_3, %c0_4] : memref<8x32xf32, #tpu.memory_space<vmem>>, vector<1x32xf32>
    tpu.vector_store %arg5[%c0_3, %c0_4], %7 {strides = array<i32>} : memref<8x32xf32, #tpu.memory_space<vmem>>, vector<1x32xf32>,
    %c1_i32 = arith.constant 1 : i32
    %9 = arith.addi %0, %c1_i32 : i32
    %10 = arith.index_cast %9 : i32 to index
    %c0_5 = arith.constant 0 : index
    %11 = memref.load %arg1[%10, %c0_5] : memref<8x8xi32, #tpu.memory_space<smem>>
    %12 = arith.index_cast %11 : i32 to index
    %c0_6 = arith.constant 0 : index
    %13 = vector.load %arg3[%12, %c0_6] : memref<128x32xf32, #tpu.memory_space<vmem>>, vector<1x32xf32>
    %c1 = arith.constant 1 : index
    %c0_7 = arith.constant 0 : index
    %14 = vector.load %arg5[%c1, %c0_7] : memref<8x32xf32, #tpu.memory_space<vmem>>, vector<1x32xf32>
    tpu.vector_store %arg5[%c1, %c0_7], %13 {strides = array<i32>} : memref<8x32xf32, #tpu.memory_space<vmem>>, vector<1x32xf32>,
    %c2_i32 = arith.constant 2 : i32
    %15 = arith.addi %0, %c2_i32 : i32
    %16 = arith.index_cast %15 : i32 to index
    %c0_8 = arith.constant 0 : index
    %17 = memref.load %arg1[%16, %c0_8] : memref<8x8xi32, #tpu.memory_space<smem>>
    %18 = arith.index_cast %17 : i32 to index
    %c0_9 = arith.constant 0 : index
    %19 = vector.load %arg3[%18, %c0_9] : memref<128x32xf32, #tpu.memory_space<vmem>>, vector<1x32xf32>
    %c2 = arith.constant 2 : index
    %c0_10 = arith.constant 0 : index
    %20 = vector.load %arg5[%c2, %c0_10] : memref<8x32xf32, #tpu.memory_space<vmem>>, vector<1x32xf32>
    tpu.vector_store %arg5[%c2, %c0_10], %19 {strides = array<i32>} : memref<8x32xf32, #tpu.memory_space<vmem>>, vector<1x32xf32>,
    %c3_i32 = arith.constant 3 : i32
    %21 = arith.addi %0, %c3_i32 : i32
    %22 = arith.index_cast %21 : i32 to index
    %c0_11 = arith.constant 0 : index
    %23 = memref.load %arg1[%22, %c0_11] : memref<8x8xi32, #tpu.memory_space<smem>>
    %24 = arith.index_cast %23 : i32 to index
    %c0_12 = arith.constant 0 : index
    %25 = vector.load %arg3[%24, %c0_12] : memref<128x32xf32, #tpu.memory_space<vmem>>, vector<1x32xf32>
    %c3 = arith.constant 3 : index
    %c0_13 = arith.constant 0 : index
    %26 = vector.load %arg5[%c3, %c0_13] : memref<8x32xf32, #tpu.memory_space<vmem>>, vector<1x32xf32>
    tpu.vector_store %arg5[%c3, %c0_13], %25 {strides = array<i32>} : memref<8x32xf32, #tpu.memory_space<vmem>>, vector<1x32xf32>,
    %c4_i32 = arith.constant 4 : i32
    %27 = arith.addi %0, %c4_i32 : i32
    %28 = arith.index_cast %27 : i32 to index
    %c0_14 = arith.constant 0 : index
    %29 = memref.load %arg1[%28, %c0_14] : memref<8x8xi32, #tpu.memory_space<smem>>
    %30 = arith.index_cast %29 : i32 to index
    %c0_15 = arith.constant 0 : index
    %31 = vector.load %arg3[%30, %c0_15] : memref<128x32xf32, #tpu.memory_space<vmem>>, vector<1x32xf32>
    %c4 = arith.constant 4 : index
    %c0_16 = arith.constant 0 : index
    %32 = vector.load %arg5[%c4, %c0_16] : memref<8x32xf32, #tpu.memory_space<vmem>>, vector<1x32xf32>
    tpu.vector_store %arg5[%c4, %c0_16], %31 {strides = array<i32>} : memref<8x32xf32, #tpu.memory_space<vmem>>, vector<1x32xf32>,
    %c5_i32 = arith.constant 5 : i32
    %33 = arith.addi %0, %c5_i32 : i32
    %34 = arith.index_cast %33 : i32 to index
    %c0_17 = arith.constant 0 : index
    %35 = memref.load %arg1[%34, %c0_17] : memref<8x8xi32, #tpu.memory_space<smem>>
    %36 = arith.index_cast %35 : i32 to index
    %c0_18 = arith.constant 0 : index
    %37 = vector.load %arg3[%36, %c0_18] : memref<128x32xf32, #tpu.memory_space<vmem>>, vector<1x32xf32>
    %c5 = arith.constant 5 : index
    %c0_19 = arith.constant 0 : index
    %38 = vector.load %arg5[%c5, %c0_19] : memref<8x32xf32, #tpu.memory_space<vmem>>, vector<1x32xf32>
    tpu.vector_store %arg5[%c5, %c0_19], %37 {strides = array<i32>} : memref<8x32xf32, #tpu.memory_space<vmem>>, vector<1x32xf32>,
    %c6_i32 = arith.constant 6 : i32
    %39 = arith.addi %0, %c6_i32 : i32
    %40 = arith.index_cast %39 : i32 to index
    %c0_20 = arith.constant 0 : index
    %41 = memref.load %arg1[%40, %c0_20] : memref<8x8xi32, #tpu.memory_space<smem>>
    %42 = arith.index_cast %41 : i32 to index
    %c0_21 = arith.constant 0 : index
    %43 = vector.load %arg3[%42, %c0_21] : memref<128x32xf32, #tpu.memory_space<vmem>>, vector<1x32xf32>
    %c6 = arith.constant 6 : index
    %c0_22 = arith.constant 0 : index
    %44 = vector.load %arg5[%c6, %c0_22] : memref<8x32xf32, #tpu.memory_space<vmem>>, vector<1x32xf32>
    tpu.vector_store %arg5[%c6, %c0_22], %43 {strides = array<i32>} : memref<8x32xf32, #tpu.memory_space<vmem>>, vector<1x32xf32>,
    %c7_i32 = arith.constant 7 : i32
    %45 = arith.addi %0, %c7_i32 : i32
    %46 = arith.index_cast %45 : i32 to index
    %c0_23 = arith.constant 0 : index
    %47 = memref.load %arg1[%46, %c0_23] : memref<8x8xi32, #tpu.memory_space<smem>>
    %48 = arith.index_cast %47 : i32 to index
    %c0_24 = arith.constant 0 : index
    %49 = vector.load %arg3[%48, %c0_24] : memref<128x32xf32, #tpu.memory_space<vmem>>, vector<1x32xf32>
    %c7 = arith.constant 7 : index
    %c0_25 = arith.constant 0 : index
    %50 = vector.load %arg5[%c7, %c0_25] : memref<8x32xf32, #tpu.memory_space<vmem>>, vector<1x32xf32>
    tpu.vector_store %arg5[%c7, %c0_25], %49 {strides = array<i32>} : memref<8x32xf32, #tpu.memory_space<vmem>>, vector<1x32xf32>,
    %c0_26 = arith.constant 0 : index
    %c0_27 = arith.constant 0 : index
    %51 = vector.load %arg5[%c0_26, %c0_27] : memref<8x32xf32, #tpu.memory_space<vmem>>, vector<8x32xf32>
    %52 = vector.extract_strided_slice %1 {offsets = [0, 0], sizes = [8, 1], strides = [1, 1]} : vector<8x8xf32> to vector<8x1xf32>
    %53 = vector.broadcast %52 : vector<8x1xf32> to vector<8x32xf32>
    %54 = arith.mulf %51, %53 : vector<8x32xf32>
    %55 = arith.addf %2, %54 : vector<8x32xf32>
    %c0_i32_28 = arith.constant 0 : i32
    %56 = arith.addi %0, %c0_i32_28 : i32
    %57 = arith.index_cast %56 : i32 to index
    %c1_29 = arith.constant 1 : index
    %58 = memref.load %arg1[%57, %c1_29] : memref<8x8xi32, #tpu.memory_space<smem>>
    %59 = arith.index_cast %58 : i32 to index
    %c0_30 = arith.constant 0 : index
    %60 = vector.load %arg3[%59, %c0_30] : memref<128x32xf32, #tpu.memory_space<vmem>>, vector<1x32xf32>
    %c0_31 = arith.constant 0 : index
    %c0_32 = arith.constant 0 : index
    %61 = vector.load %arg5[%c0_31, %c0_32] : memref<8x32xf32, #tpu.memory_space<vmem>>, vector<1x32xf32>
    tpu.vector_store %arg5[%c0_31, %c0_32], %60 {strides = array<i32>} : memref<8x32xf32, #tpu.memory_space<vmem>>, vector<1x32xf32>,
    %c1_i32_33 = arith.constant 1 : i32
    %62 = arith.addi %0, %c1_i32_33 : i32
    %63 = arith.index_cast %62 : i32 to index
    %c1_34 = arith.constant 1 : index
    %64 = memref.load %arg1[%63, %c1_34] : memref<8x8xi32, #tpu.memory_space<smem>>
    %65 = arith.index_cast %64 : i32 to index
    %c0_35 = arith.constant 0 : index
    %66 = vector.load %arg3[%65, %c0_35] : memref<128x32xf32, #tpu.memory_space<vmem>>, vector<1x32xf32>
    %c1_36 = arith.constant 1 : index
    %c0_37 = arith.constant 0 : index
    %67 = vector.load %arg5[%c1_36, %c0_37] : memref<8x32xf32, #tpu.memory_space<vmem>>, vector<1x32xf32>
    tpu.vector_store %arg5[%c1_36, %c0_37], %66 {strides = array<i32>} : memref<8x32xf32, #tpu.memory_space<vmem>>, vector<1x32xf32>,
    %c2_i32_38 = arith.constant 2 : i32
    %68 = arith.addi %0, %c2_i32_38 : i32
    %69 = arith.index_cast %68 : i32 to index
    %c1_39 = arith.constant 1 : index
    %70 = memref.load %arg1[%69, %c1_39] : memref<8x8xi32, #tpu.memory_space<smem>>
    %71 = arith.index_cast %70 : i32 to index
    %c0_40 = arith.constant 0 : index
    %72 = vector.load %arg3[%71, %c0_40] : memref<128x32xf32, #tpu.memory_space<vmem>>, vector<1x32xf32>
    %c2_41 = arith.constant 2 : index
    %c0_42 = arith.constant 0 : index
    %73 = vector.load %arg5[%c2_41, %c0_42] : memref<8x32xf32, #tpu.memory_space<vmem>>, vector<1x32xf32>
    tpu.vector_store %arg5[%c2_41, %c0_42], %72 {strides = array<i32>} : memref<8x32xf32, #tpu.memory_space<vmem>>, vector<1x32xf32>,
    %c3_i32_43 = arith.constant 3 : i32
    %74 = arith.addi %0, %c3_i32_43 : i32
    %75 = arith.index_cast %74 : i32 to index
    %c1_44 = arith.constant 1 : index
    %76 = memref.load %arg1[%75, %c1_44] : memref<8x8xi32, #tpu.memory_space<smem>>
    %77 = arith.index_cast %76 : i32 to index
    %c0_45 = arith.constant 0 : index
    %78 = vector.load %arg3[%77, %c0_45] : memref<128x32xf32, #tpu.memory_space<vmem>>, vector<1x32xf32>
    %c3_46 = arith.constant 3 : index
    %c0_47 = arith.constant 0 : index
    %79 = vector.load %arg5[%c3_46, %c0_47] : memref<8x32xf32, #tpu.memory_space<vmem>>, vector<1x32xf32>
    tpu.vector_store %arg5[%c3_46, %c0_47], %78 {strides = array<i32>} : memref<8x32xf32, #tpu.memory_space<vmem>>, vector<1x32xf32>,
    %c4_i32_48 = arith.constant 4 : i32
    %80 = arith.addi %0, %c4_i32_48 : i32
    %81 = arith.index_cast %80 : i32 to index
    %c1_49 = arith.constant 1 : index
    %82 = memref.load %arg1[%81, %c1_49] : memref<8x8xi32, #tpu.memory_space<smem>>
    %83 = arith.index_cast %82 : i32 to index
    %c0_50 = arith.constant 0 : index
    %84 = vector.load %arg3[%83, %c0_50] : memref<128x32xf32, #tpu.memory_space<vmem>>, vector<1x32xf32>
    %c4_51 = arith.constant 4 : index
    %c0_52 = arith.constant 0 : index
    %85 = vector.load %arg5[%c4_51, %c0_52] : memref<8x32xf32, #tpu.memory_space<vmem>>, vector<1x32xf32>
    tpu.vector_store %arg5[%c4_51, %c0_52], %84 {strides = array<i32>} : memref<8x32xf32, #tpu.memory_space<vmem>>, vector<1x32xf32>,
    %c5_i32_53 = arith.constant 5 : i32
    %86 = arith.addi %0, %c5_i32_53 : i32
    %87 = arith.index_cast %86 : i32 to index
    %c1_54 = arith.constant 1 : index
    %88 = memref.load %arg1[%87, %c1_54] : memref<8x8xi32, #tpu.memory_space<smem>>
    %89 = arith.index_cast %88 : i32 to index
    %c0_55 = arith.constant 0 : index
    %90 = vector.load %arg3[%89, %c0_55] : memref<128x32xf32, #tpu.memory_space<vmem>>, vector<1x32xf32>
    %c5_56 = arith.constant 5 : index
    %c0_57 = arith.constant 0 : index
    %91 = vector.load %arg5[%c5_56, %c0_57] : memref<8x32xf32, #tpu.memory_space<vmem>>, vector<1x32xf32>
    tpu.vector_store %arg5[%c5_56, %c0_57], %90 {strides = array<i32>} : memref<8x32xf32, #tpu.memory_space<vmem>>, vector<1x32xf32>,
    %c6_i32_58 = arith.constant 6 : i32
    %92 = arith.addi %0, %c6_i32_58 : i32
    %93 = arith.index_cast %92 : i32 to index
    %c1_59 = arith.constant 1 : index
    %94 = memref.load %arg1[%93, %c1_59] : memref<8x8xi32, #tpu.memory_space<smem>>
    %95 = arith.index_cast %94 : i32 to index
    %c0_60 = arith.constant 0 : index
    %96 = vector.load %arg3[%95, %c0_60] : memref<128x32xf32, #tpu.memory_space<vmem>>, vector<1x32xf32>
    %c6_61 = arith.constant 6 : index
    %c0_62 = arith.constant 0 : index
    %97 = vector.load %arg5[%c6_61, %c0_62] : memref<8x32xf32, #tpu.memory_space<vmem>>, vector<1x32xf32>
    tpu.vector_store %arg5[%c6_61, %c0_62], %96 {strides = array<i32>} : memref<8x32xf32, #tpu.memory_space<vmem>>, vector<1x32xf32>,
    %c7_i32_63 = arith.constant 7 : i32
    %98 = arith.addi %0, %c7_i32_63 : i32
    %99 = arith.index_cast %98 : i32 to index
    %c1_64 = arith.constant 1 : index
    %100 = memref.load %arg1[%99, %c1_64] : memref<8x8xi32, #tpu.memory_space<smem>>
    %101 = arith.index_cast %100 : i32 to index
    %c0_65 = arith.constant 0 : index
    %102 = vector.load %arg3[%101, %c0_65] : memref<128x32xf32, #tpu.memory_space<vmem>>, vector<1x32xf32>
    %c7_66 = arith.constant 7 : index
    %c0_67 = arith.constant 0 : index
    %103 = vector.load %arg5[%c7_66, %c0_67] : memref<8x32xf32, #tpu.memory_space<vmem>>, vector<1x32xf32>
    tpu.vector_store %arg5[%c7_66, %c0_67], %102 {strides = array<i32>} : memref<8x32xf32, #tpu.memory_space<vmem>>, vector<1x32xf32>,
    %c0_68 = arith.constant 0 : index
    %c0_69 = arith.constant 0 : index
    %104 = vector.load %arg5[%c0_68, %c0_69] : memref<8x32xf32, #tpu.memory_space<vmem>>, vector<8x32xf32>
    %105 = vector.extract_strided_slice %1 {offsets = [0, 1], sizes = [8, 1], strides = [1, 1]} : vector<8x8xf32> to vector<8x1xf32>
    %106 = vector.broadcast %105 : vector<8x1xf32> to vector<8x32xf32>
    %107 = arith.mulf %104, %106 : vector<8x32xf32>
    %108 = arith.addf %55, %107 : vector<8x32xf32>
    %c0_i32_70 = arith.constant 0 : i32
    %109 = arith.addi %0, %c0_i32_70 : i32
    %110 = arith.index_cast %109 : i32 to index
    %c2_71 = arith.constant 2 : index
    %111 = memref.load %arg1[%110, %c2_71] : memref<8x8xi32, #tpu.memory_space<smem>>
    %112 = arith.index_cast %111 : i32 to index
    %c0_72 = arith.constant 0 : index
    %113 = vector.load %arg3[%112, %c0_72] : memref<128x32xf32, #tpu.memory_space<vmem>>, vector<1x32xf32>
    %c0_73 = arith.constant 0 : index
    %c0_74 = arith.constant 0 : index
    %114 = vector.load %arg5[%c0_73, %c0_74] : memref<8x32xf32, #tpu.memory_space<vmem>>, vector<1x32xf32>
    tpu.vector_store %arg5[%c0_73, %c0_74], %113 {strides = array<i32>} : memref<8x32xf32, #tpu.memory_space<vmem>>, vector<1x32xf32>,
    %c1_i32_75 = arith.constant 1 : i32
    %115 = arith.addi %0, %c1_i32_75 : i32
    %116 = arith.index_cast %115 : i32 to index
    %c2_76 = arith.constant 2 : index
    %117 = memref.load %arg1[%116, %c2_76] : memref<8x8xi32, #tpu.memory_space<smem>>
    %118 = arith.index_cast %117 : i32 to index
    %c0_77 = arith.constant 0 : index
    %119 = vector.load %arg3[%118, %c0_77] : memref<128x32xf32, #tpu.memory_space<vmem>>, vector<1x32xf32>
    %c1_78 = arith.constant 1 : index
    %c0_79 = arith.constant 0 : index
    %120 = vector.load %arg5[%c1_78, %c0_79] : memref<8x32xf32, #tpu.memory_space<vmem>>, vector<1x32xf32>
    tpu.vector_store %arg5[%c1_78, %c0_79], %119 {strides = array<i32>} : memref<8x32xf32, #tpu.memory_space<vmem>>, vector<1x32xf32>,
    %c2_i32_80 = arith.constant 2 : i32
    %121 = arith.addi %0, %c2_i32_80 : i32
    %122 = arith.index_cast %121 : i32 to index
    %c2_81 = arith.constant 2 : index
    %123 = memref.load %arg1[%122, %c2_81] : memref<8x8xi32, #tpu.memory_space<smem>>
    %124 = arith.index_cast %123 : i32 to index
    %c0_82 = arith.constant 0 : index
    %125 = vector.load %arg3[%124, %c0_82] : memref<128x32xf32, #tpu.memory_space<vmem>>, vector<1x32xf32>
    %c2_83 = arith.constant 2 : index
    %c0_84 = arith.constant 0 : index
    %126 = vector.load %arg5[%c2_83, %c0_84] : memref<8x32xf32, #tpu.memory_space<vmem>>, vector<1x32xf32>
    tpu.vector_store %arg5[%c2_83, %c0_84], %125 {strides = array<i32>} : memref<8x32xf32, #tpu.memory_space<vmem>>, vector<1x32xf32>,
    %c3_i32_85 = arith.constant 3 : i32
    %127 = arith.addi %0, %c3_i32_85 : i32
    %128 = arith.index_cast %127 : i32 to index
    %c2_86 = arith.constant 2 : index
    %129 = memref.load %arg1[%128, %c2_86] : memref<8x8xi32, #tpu.memory_space<smem>>
    %130 = arith.index_cast %129 : i32 to index
    %c0_87 = arith.constant 0 : index
    %131 = vector.load %arg3[%130, %c0_87] : memref<128x32xf32, #tpu.memory_space<vmem>>, vector<1x32xf32>
    %c3_88 = arith.constant 3 : index
    %c0_89 = arith.constant 0 : index
    %132 = vector.load %arg5[%c3_88, %c0_89] : memref<8x32xf32, #tpu.memory_space<vmem>>, vector<1x32xf32>
    tpu.vector_store %arg5[%c3_88, %c0_89], %131 {strides = array<i32>} : memref<8x32xf32, #tpu.memory_space<vmem>>, vector<1x32xf32>,
    %c4_i32_90 = arith.constant 4 : i32
    %133 = arith.addi %0, %c4_i32_90 : i32
    %134 = arith.index_cast %133 : i32 to index
    %c2_91 = arith.constant 2 : index
    %135 = memref.load %arg1[%134, %c2_91] : memref<8x8xi32, #tpu.memory_space<smem>>
    %136 = arith.index_cast %135 : i32 to index
    %c0_92 = arith.constant 0 : index
    %137 = vector.load %arg3[%136, %c0_92] : memref<128x32xf32, #tpu.memory_space<vmem>>, vector<1x32xf32>
    %c4_93 = arith.constant 4 : index
    %c0_94 = arith.constant 0 : index
    %138 = vector.load %arg5[%c4_93, %c0_94] : memref<8x32xf32, #tpu.memory_space<vmem>>, vector<1x32xf32>
    tpu.vector_store %arg5[%c4_93, %c0_94], %137 {strides = array<i32>} : memref<8x32xf32, #tpu.memory_space<vmem>>, vector<1x32xf32>,
    %c5_i32_95 = arith.constant 5 : i32
    %139 = arith.addi %0, %c5_i32_95 : i32
    %140 = arith.index_cast %139 : i32 to index
    %c2_96 = arith.constant 2 : index
    %141 = memref.load %arg1[%140, %c2_96] : memref<8x8xi32, #tpu.memory_space<smem>>
    %142 = arith.index_cast %141 : i32 to index
    %c0_97 = arith.constant 0 : index
    %143 = vector.load %arg3[%142, %c0_97] : memref<128x32xf32, #tpu.memory_space<vmem>>, vector<1x32xf32>
    %c5_98 = arith.constant 5 : index
    %c0_99 = arith.constant 0 : index
    %144 = vector.load %arg5[%c5_98, %c0_99] : memref<8x32xf32, #tpu.memory_space<vmem>>, vector<1x32xf32>
    tpu.vector_store %arg5[%c5_98, %c0_99], %143 {strides = array<i32>} : memref<8x32xf32, #tpu.memory_space<vmem>>, vector<1x32xf32>,
    %c6_i32_100 = arith.constant 6 : i32
    %145 = arith.addi %0, %c6_i32_100 : i32
    %146 = arith.index_cast %145 : i32 to index
    %c2_101 = arith.constant 2 : index
    %147 = memref.load %arg1[%146, %c2_101] : memref<8x8xi32, #tpu.memory_space<smem>>
    %148 = arith.index_cast %147 : i32 to index
    %c0_102 = arith.constant 0 : index
    %149 = vector.load %arg3[%148, %c0_102] : memref<128x32xf32, #tpu.memory_space<vmem>>, vector<1x32xf32>
    %c6_103 = arith.constant 6 : index
    %c0_104 = arith.constant 0 : index
    %150 = vector.load %arg5[%c6_103, %c0_104] : memref<8x32xf32, #tpu.memory_space<vmem>>, vector<1x32xf32>
    tpu.vector_store %arg5[%c6_103, %c0_104], %149 {strides = array<i32>} : memref<8x32xf32, #tpu.memory_space<vmem>>, vector<1x32xf32>,
    %c7_i32_105 = arith.constant 7 : i32
    %151 = arith.addi %0, %c7_i32_105 : i32
    %152 = arith.index_cast %151 : i32 to index
    %c2_106 = arith.constant 2 : index
    %153 = memref.load %arg1[%152, %c2_106] : memref<8x8xi32, #tpu.memory_space<smem>>
    %154 = arith.index_cast %153 : i32 to index
    %c0_107 = arith.constant 0 : index
    %155 = vector.load %arg3[%154, %c0_107] : memref<128x32xf32, #tpu.memory_space<vmem>>, vector<1x32xf32>
    %c7_108 = arith.constant 7 : index
    %c0_109 = arith.constant 0 : index
    %156 = vector.load %arg5[%c7_108, %c0_109] : memref<8x32xf32, #tpu.memory_space<vmem>>, vector<1x32xf32>
    tpu.vector_store %arg5[%c7_108, %c0_109], %155 {strides = array<i32>} : memref<8x32xf32, #tpu.memory_space<vmem>>, vector<1x32xf32>,
    %c0_110 = arith.constant 0 : index
    %c0_111 = arith.constant 0 : index
    %157 = vector.load %arg5[%c0_110, %c0_111] : memref<8x32xf32, #tpu.memory_space<vmem>>, vector<8x32xf32>
    %158 = vector.extract_strided_slice %1 {offsets = [0, 2], sizes = [8, 1], strides = [1, 1]} : vector<8x8xf32> to vector<8x1xf32>
    %159 = vector.broadcast %158 : vector<8x1xf32> to vector<8x32xf32>
    %160 = arith.mulf %157, %159 : vector<8x32xf32>
    %161 = arith.addf %108, %160 : vector<8x32xf32>
    %c0_i32_112 = arith.constant 0 : i32
    %162 = arith.addi %0, %c0_i32_112 : i32
    %163 = arith.index_cast %162 : i32 to index
    %c3_113 = arith.constant 3 : index
    %164 = memref.load %arg1[%163, %c3_113] : memref<8x8xi32, #tpu.memory_space<smem>>
    %165 = arith.index_cast %164 : i32 to index
    %c0_114 = arith.constant 0 : index
    %166 = vector.load %arg3[%165, %c0_114] : memref<128x32xf32, #tpu.memory_space<vmem>>, vector<1x32xf32>
    %c0_115 = arith.constant 0 : index
    %c0_116 = arith.constant 0 : index
    %167 = vector.load %arg5[%c0_115, %c0_116] : memref<8x32xf32, #tpu.memory_space<vmem>>, vector<1x32xf32>
    tpu.vector_store %arg5[%c0_115, %c0_116], %166 {strides = array<i32>} : memref<8x32xf32, #tpu.memory_space<vmem>>, vector<1x32xf32>,
    %c1_i32_117 = arith.constant 1 : i32
    %168 = arith.addi %0, %c1_i32_117 : i32
    %169 = arith.index_cast %168 : i32 to index
    %c3_118 = arith.constant 3 : index
    %170 = memref.load %arg1[%169, %c3_118] : memref<8x8xi32, #tpu.memory_space<smem>>
    %171 = arith.index_cast %170 : i32 to index
    %c0_119 = arith.constant 0 : index
    %172 = vector.load %arg3[%171, %c0_119] : memref<128x32xf32, #tpu.memory_space<vmem>>, vector<1x32xf32>
    %c1_120 = arith.constant 1 : index
    %c0_121 = arith.constant 0 : index
    %173 = vector.load %arg5[%c1_120, %c0_121] : memref<8x32xf32, #tpu.memory_space<vmem>>, vector<1x32xf32>
    tpu.vector_store %arg5[%c1_120, %c0_121], %172 {strides = array<i32>} : memref<8x32xf32, #tpu.memory_space<vmem>>, vector<1x32xf32>,
    %c2_i32_122 = arith.constant 2 : i32
    %174 = arith.addi %0, %c2_i32_122 : i32
    %175 = arith.index_cast %174 : i32 to index
    %c3_123 = arith.constant 3 : index
    %176 = memref.load %arg1[%175, %c3_123] : memref<8x8xi32, #tpu.memory_space<smem>>
    %177 = arith.index_cast %176 : i32 to index
    %c0_124 = arith.constant 0 : index
    %178 = vector.load %arg3[%177, %c0_124] : memref<128x32xf32, #tpu.memory_space<vmem>>, vector<1x32xf32>
    %c2_125 = arith.constant 2 : index
    %c0_126 = arith.constant 0 : index
    %179 = vector.load %arg5[%c2_125, %c0_126] : memref<8x32xf32, #tpu.memory_space<vmem>>, vector<1x32xf32>
    tpu.vector_store %arg5[%c2_125, %c0_126], %178 {strides = array<i32>} : memref<8x32xf32, #tpu.memory_space<vmem>>, vector<1x32xf32>,
    %c3_i32_127 = arith.constant 3 : i32
    %180 = arith.addi %0, %c3_i32_127 : i32
    %181 = arith.index_cast %180 : i32 to index
    %c3_128 = arith.constant 3 : index
    %182 = memref.load %arg1[%181, %c3_128] : memref<8x8xi32, #tpu.memory_space<smem>>
    %183 = arith.index_cast %182 : i32 to index
    %c0_129 = arith.constant 0 : index
    %184 = vector.load %arg3[%183, %c0_129] : memref<128x32xf32, #tpu.memory_space<vmem>>, vector<1x32xf32>
    %c3_130 = arith.constant 3 : index
    %c0_131 = arith.constant 0 : index
    %185 = vector.load %arg5[%c3_130, %c0_131] : memref<8x32xf32, #tpu.memory_space<vmem>>, vector<1x32xf32>
    tpu.vector_store %arg5[%c3_130, %c0_131], %184 {strides = array<i32>} : memref<8x32xf32, #tpu.memory_space<vmem>>, vector<1x32xf32>,
    %c4_i32_132 = arith.constant 4 : i32
    %186 = arith.addi %0, %c4_i32_132 : i32
    %187 = arith.index_cast %186 : i32 to index
    %c3_133 = arith.constant 3 : index
    %188 = memref.load %arg1[%187, %c3_133] : memref<8x8xi32, #tpu.memory_space<smem>>
    %189 = arith.index_cast %188 : i32 to index
    %c0_134 = arith.constant 0 : index
    %190 = vector.load %arg3[%189, %c0_134] : memref<128x32xf32, #tpu.memory_space<vmem>>, vector<1x32xf32>
    %c4_135 = arith.constant 4 : index
    %c0_136 = arith.constant 0 : index
    %191 = vector.load %arg5[%c4_135, %c0_136] : memref<8x32xf32, #tpu.memory_space<vmem>>, vector<1x32xf32>
    tpu.vector_store %arg5[%c4_135, %c0_136], %190 {strides = array<i32>} : memref<8x32xf32, #tpu.memory_space<vmem>>, vector<1x32xf32>,
    %c5_i32_137 = arith.constant 5 : i32
    %192 = arith.addi %0, %c5_i32_137 : i32
    %193 = arith.index_cast %192 : i32 to index
    %c3_138 = arith.constant 3 : index
    %194 = memref.load %arg1[%193, %c3_138] : memref<8x8xi32, #tpu.memory_space<smem>>
    %195 = arith.index_cast %194 : i32 to index
    %c0_139 = arith.constant 0 : index
    %196 = vector.load %arg3[%195, %c0_139] : memref<128x32xf32, #tpu.memory_space<vmem>>, vector<1x32xf32>
    %c5_140 = arith.constant 5 : index
    %c0_141 = arith.constant 0 : index
    %197 = vector.load %arg5[%c5_140, %c0_141] : memref<8x32xf32, #tpu.memory_space<vmem>>, vector<1x32xf32>
    tpu.vector_store %arg5[%c5_140, %c0_141], %196 {strides = array<i32>} : memref<8x32xf32, #tpu.memory_space<vmem>>, vector<1x32xf32>,
    %c6_i32_142 = arith.constant 6 : i32
    %198 = arith.addi %0, %c6_i32_142 : i32
    %199 = arith.index_cast %198 : i32 to index
    %c3_143 = arith.constant 3 : index
    %200 = memref.load %arg1[%199, %c3_143] : memref<8x8xi32, #tpu.memory_space<smem>>
    %201 = arith.index_cast %200 : i32 to index
    %c0_144 = arith.constant 0 : index
    %202 = vector.load %arg3[%201, %c0_144] : memref<128x32xf32, #tpu.memory_space<vmem>>, vector<1x32xf32>
    %c6_145 = arith.constant 6 : index
    %c0_146 = arith.constant 0 : index
    %203 = vector.load %arg5[%c6_145, %c0_146] : memref<8x32xf32, #tpu.memory_space<vmem>>, vector<1x32xf32>
    tpu.vector_store %arg5[%c6_145, %c0_146], %202 {strides = array<i32>} : memref<8x32xf32, #tpu.memory_space<vmem>>, vector<1x32xf32>,
    %c7_i32_147 = arith.constant 7 : i32
    %204 = arith.addi %0, %c7_i32_147 : i32
    %205 = arith.index_cast %204 : i32 to index
    %c3_148 = arith.constant 3 : index
    %206 = memref.load %arg1[%205, %c3_148] : memref<8x8xi32, #tpu.memory_space<smem>>
    %207 = arith.index_cast %206 : i32 to index
    %c0_149 = arith.constant 0 : index
    %208 = vector.load %arg3[%207, %c0_149] : memref<128x32xf32, #tpu.memory_space<vmem>>, vector<1x32xf32>
    %c7_150 = arith.constant 7 : index
    %c0_151 = arith.constant 0 : index
    %209 = vector.load %arg5[%c7_150, %c0_151] : memref<8x32xf32, #tpu.memory_space<vmem>>, vector<1x32xf32>
    tpu.vector_store %arg5[%c7_150, %c0_151], %208 {strides = array<i32>} : memref<8x32xf32, #tpu.memory_space<vmem>>, vector<1x32xf32>,
    %c0_152 = arith.constant 0 : index
    %c0_153 = arith.constant 0 : index
    %210 = vector.load %arg5[%c0_152, %c0_153] : memref<8x32xf32, #tpu.memory_space<vmem>>, vector<8x32xf32>
    %211 = vector.extract_strided_slice %1 {offsets = [0, 3], sizes = [8, 1], strides = [1, 1]} : vector<8x8xf32> to vector<8x1xf32>
    %212 = vector.broadcast %211 : vector<8x1xf32> to vector<8x32xf32>
    %213 = arith.mulf %210, %212 : vector<8x32xf32>
    %214 = arith.addf %161, %213 : vector<8x32xf32>
    %c0_i32_154 = arith.constant 0 : i32
    %215 = arith.addi %0, %c0_i32_154 : i32
    %216 = arith.index_cast %215 : i32 to index
    %c4_155 = arith.constant 4 : index
    %217 = memref.load %arg1[%216, %c4_155] : memref<8x8xi32, #tpu.memory_space<smem>>
    %218 = arith.index_cast %217 : i32 to index
    %c0_156 = arith.constant 0 : index
    %219 = vector.load %arg3[%218, %c0_156] : memref<128x32xf32, #tpu.memory_space<vmem>>, vector<1x32xf32>
    %c0_157 = arith.constant 0 : index
    %c0_158 = arith.constant 0 : index
    %220 = vector.load %arg5[%c0_157, %c0_158] : memref<8x32xf32, #tpu.memory_space<vmem>>, vector<1x32xf32>
    tpu.vector_store %arg5[%c0_157, %c0_158], %219 {strides = array<i32>} : memref<8x32xf32, #tpu.memory_space<vmem>>, vector<1x32xf32>,
    %c1_i32_159 = arith.constant 1 : i32
    %221 = arith.addi %0, %c1_i32_159 : i32
    %222 = arith.index_cast %221 : i32 to index
    %c4_160 = arith.constant 4 : index
    %223 = memref.load %arg1[%222, %c4_160] : memref<8x8xi32, #tpu.memory_space<smem>>
    %224 = arith.index_cast %223 : i32 to index
    %c0_161 = arith.constant 0 : index
    %225 = vector.load %arg3[%224, %c0_161] : memref<128x32xf32, #tpu.memory_space<vmem>>, vector<1x32xf32>
    %c1_162 = arith.constant 1 : index
    %c0_163 = arith.constant 0 : index
    %226 = vector.load %arg5[%c1_162, %c0_163] : memref<8x32xf32, #tpu.memory_space<vmem>>, vector<1x32xf32>
    tpu.vector_store %arg5[%c1_162, %c0_163], %225 {strides = array<i32>} : memref<8x32xf32, #tpu.memory_space<vmem>>, vector<1x32xf32>,
    %c2_i32_164 = arith.constant 2 : i32
    %227 = arith.addi %0, %c2_i32_164 : i32
    %228 = arith.index_cast %227 : i32 to index
    %c4_165 = arith.constant 4 : index
    %229 = memref.load %arg1[%228, %c4_165] : memref<8x8xi32, #tpu.memory_space<smem>>
    %230 = arith.index_cast %229 : i32 to index
    %c0_166 = arith.constant 0 : index
    %231 = vector.load %arg3[%230, %c0_166] : memref<128x32xf32, #tpu.memory_space<vmem>>, vector<1x32xf32>
    %c2_167 = arith.constant 2 : index
    %c0_168 = arith.constant 0 : index
    %232 = vector.load %arg5[%c2_167, %c0_168] : memref<8x32xf32, #tpu.memory_space<vmem>>, vector<1x32xf32>
    tpu.vector_store %arg5[%c2_167, %c0_168], %231 {strides = array<i32>} : memref<8x32xf32, #tpu.memory_space<vmem>>, vector<1x32xf32>,
    %c3_i32_169 = arith.constant 3 : i32
    %233 = arith.addi %0, %c3_i32_169 : i32
    %234 = arith.index_cast %233 : i32 to index
    %c4_170 = arith.constant 4 : index
    %235 = memref.load %arg1[%234, %c4_170] : memref<8x8xi32, #tpu.memory_space<smem>>
    %236 = arith.index_cast %235 : i32 to index
    %c0_171 = arith.constant 0 : index
    %237 = vector.load %arg3[%236, %c0_171] : memref<128x32xf32, #tpu.memory_space<vmem>>, vector<1x32xf32>
    %c3_172 = arith.constant 3 : index
    %c0_173 = arith.constant 0 : index
    %238 = vector.load %arg5[%c3_172, %c0_173] : memref<8x32xf32, #tpu.memory_space<vmem>>, vector<1x32xf32>
    tpu.vector_store %arg5[%c3_172, %c0_173], %237 {strides = array<i32>} : memref<8x32xf32, #tpu.memory_space<vmem>>, vector<1x32xf32>,
    %c4_i32_174 = arith.constant 4 : i32
    %239 = arith.addi %0, %c4_i32_174 : i32
    %240 = arith.index_cast %239 : i32 to index
    %c4_175 = arith.constant 4 : index
    %241 = memref.load %arg1[%240, %c4_175] : memref<8x8xi32, #tpu.memory_space<smem>>
    %242 = arith.index_cast %241 : i32 to index
    %c0_176 = arith.constant 0 : index
    %243 = vector.load %arg3[%242, %c0_176] : memref<128x32xf32, #tpu.memory_space<vmem>>, vector<1x32xf32>
    %c4_177 = arith.constant 4 : index
    %c0_178 = arith.constant 0 : index
    %244 = vector.load %arg5[%c4_177, %c0_178] : memref<8x32xf32, #tpu.memory_space<vmem>>, vector<1x32xf32>
    tpu.vector_store %arg5[%c4_177, %c0_178], %243 {strides = array<i32>} : memref<8x32xf32, #tpu.memory_space<vmem>>, vector<1x32xf32>,
    %c5_i32_179 = arith.constant 5 : i32
    %245 = arith.addi %0, %c5_i32_179 : i32
    %246 = arith.index_cast %245 : i32 to index
    %c4_180 = arith.constant 4 : index
    %247 = memref.load %arg1[%246, %c4_180] : memref<8x8xi32, #tpu.memory_space<smem>>
    %248 = arith.index_cast %247 : i32 to index
    %c0_181 = arith.constant 0 : index
    %249 = vector.load %arg3[%248, %c0_181] : memref<128x32xf32, #tpu.memory_space<vmem>>, vector<1x32xf32>
    %c5_182 = arith.constant 5 : index
    %c0_183 = arith.constant 0 : index
    %250 = vector.load %arg5[%c5_182, %c0_183] : memref<8x32xf32, #tpu.memory_space<vmem>>, vector<1x32xf32>
    tpu.vector_store %arg5[%c5_182, %c0_183], %249 {strides = array<i32>} : memref<8x32xf32, #tpu.memory_space<vmem>>, vector<1x32xf32>,
    %c6_i32_184 = arith.constant 6 : i32
    %251 = arith.addi %0, %c6_i32_184 : i32
    %252 = arith.index_cast %251 : i32 to index
    %c4_185 = arith.constant 4 : index
    %253 = memref.load %arg1[%252, %c4_185] : memref<8x8xi32, #tpu.memory_space<smem>>
    %254 = arith.index_cast %253 : i32 to index
    %c0_186 = arith.constant 0 : index
    %255 = vector.load %arg3[%254, %c0_186] : memref<128x32xf32, #tpu.memory_space<vmem>>, vector<1x32xf32>
    %c6_187 = arith.constant 6 : index
    %c0_188 = arith.constant 0 : index
    %256 = vector.load %arg5[%c6_187, %c0_188] : memref<8x32xf32, #tpu.memory_space<vmem>>, vector<1x32xf32>
    tpu.vector_store %arg5[%c6_187, %c0_188], %255 {strides = array<i32>} : memref<8x32xf32, #tpu.memory_space<vmem>>, vector<1x32xf32>,
    %c7_i32_189 = arith.constant 7 : i32
    %257 = arith.addi %0, %c7_i32_189 : i32
    %258 = arith.index_cast %257 : i32 to index
    %c4_190 = arith.constant 4 : index
    %259 = memref.load %arg1[%258, %c4_190] : memref<8x8xi32, #tpu.memory_space<smem>>
    %260 = arith.index_cast %259 : i32 to index
    %c0_191 = arith.constant 0 : index
    %261 = vector.load %arg3[%260, %c0_191] : memref<128x32xf32, #tpu.memory_space<vmem>>, vector<1x32xf32>
    %c7_192 = arith.constant 7 : index
    %c0_193 = arith.constant 0 : index
    %262 = vector.load %arg5[%c7_192, %c0_193] : memref<8x32xf32, #tpu.memory_space<vmem>>, vector<1x32xf32>
    tpu.vector_store %arg5[%c7_192, %c0_193], %261 {strides = array<i32>} : memref<8x32xf32, #tpu.memory_space<vmem>>, vector<1x32xf32>,
    %c0_194 = arith.constant 0 : index
    %c0_195 = arith.constant 0 : index
    %263 = vector.load %arg5[%c0_194, %c0_195] : memref<8x32xf32, #tpu.memory_space<vmem>>, vector<8x32xf32>
    %264 = vector.extract_strided_slice %1 {offsets = [0, 4], sizes = [8, 1], strides = [1, 1]} : vector<8x8xf32> to vector<8x1xf32>
    %265 = vector.broadcast %264 : vector<8x1xf32> to vector<8x32xf32>
    %266 = arith.mulf %263, %265 : vector<8x32xf32>
    %267 = arith.addf %214, %266 : vector<8x32xf32>
    %c0_i32_196 = arith.constant 0 : i32
    %268 = arith.addi %0, %c0_i32_196 : i32
    %269 = arith.index_cast %268 : i32 to index
    %c5_197 = arith.constant 5 : index
    %270 = memref.load %arg1[%269, %c5_197] : memref<8x8xi32, #tpu.memory_space<smem>>
    %271 = arith.index_cast %270 : i32 to index
    %c0_198 = arith.constant 0 : index
    %272 = vector.load %arg3[%271, %c0_198] : memref<128x32xf32, #tpu.memory_space<vmem>>, vector<1x32xf32>
    %c0_199 = arith.constant 0 : index
    %c0_200 = arith.constant 0 : index
    %273 = vector.load %arg5[%c0_199, %c0_200] : memref<8x32xf32, #tpu.memory_space<vmem>>, vector<1x32xf32>
    tpu.vector_store %arg5[%c0_199, %c0_200], %272 {strides = array<i32>} : memref<8x32xf32, #tpu.memory_space<vmem>>, vector<1x32xf32>,
    %c1_i32_201 = arith.constant 1 : i32
    %274 = arith.addi %0, %c1_i32_201 : i32
    %275 = arith.index_cast %274 : i32 to index
    %c5_202 = arith.constant 5 : index
    %276 = memref.load %arg1[%275, %c5_202] : memref<8x8xi32, #tpu.memory_space<smem>>
    %277 = arith.index_cast %276 : i32 to index
    %c0_203 = arith.constant 0 : index
    %278 = vector.load %arg3[%277, %c0_203] : memref<128x32xf32, #tpu.memory_space<vmem>>, vector<1x32xf32>
    %c1_204 = arith.constant 1 : index
    %c0_205 = arith.constant 0 : index
    %279 = vector.load %arg5[%c1_204, %c0_205] : memref<8x32xf32, #tpu.memory_space<vmem>>, vector<1x32xf32>
    tpu.vector_store %arg5[%c1_204, %c0_205], %278 {strides = array<i32>} : memref<8x32xf32, #tpu.memory_space<vmem>>, vector<1x32xf32>,
    %c2_i32_206 = arith.constant 2 : i32
    %280 = arith.addi %0, %c2_i32_206 : i32
    %281 = arith.index_cast %280 : i32 to index
    %c5_207 = arith.constant 5 : index
    %282 = memref.load %arg1[%281, %c5_207] : memref<8x8xi32, #tpu.memory_space<smem>>
    %283 = arith.index_cast %282 : i32 to index
    %c0_208 = arith.constant 0 : index
    %284 = vector.load %arg3[%283, %c0_208] : memref<128x32xf32, #tpu.memory_space<vmem>>, vector<1x32xf32>
    %c2_209 = arith.constant 2 : index
    %c0_210 = arith.constant 0 : index
    %285 = vector.load %arg5[%c2_209, %c0_210] : memref<8x32xf32, #tpu.memory_space<vmem>>, vector<1x32xf32>
    tpu.vector_store %arg5[%c2_209, %c0_210], %284 {strides = array<i32>} : memref<8x32xf32, #tpu.memory_space<vmem>>, vector<1x32xf32>,
    %c3_i32_211 = arith.constant 3 : i32
    %286 = arith.addi %0, %c3_i32_211 : i32
    %287 = arith.index_cast %286 : i32 to index
    %c5_212 = arith.constant 5 : index
    %288 = memref.load %arg1[%287, %c5_212] : memref<8x8xi32, #tpu.memory_space<smem>>
    %289 = arith.index_cast %288 : i32 to index
    %c0_213 = arith.constant 0 : index
    %290 = vector.load %arg3[%289, %c0_213] : memref<128x32xf32, #tpu.memory_space<vmem>>, vector<1x32xf32>
    %c3_214 = arith.constant 3 : index
    %c0_215 = arith.constant 0 : index
    %291 = vector.load %arg5[%c3_214, %c0_215] : memref<8x32xf32, #tpu.memory_space<vmem>>, vector<1x32xf32>
    tpu.vector_store %arg5[%c3_214, %c0_215], %290 {strides = array<i32>} : memref<8x32xf32, #tpu.memory_space<vmem>>, vector<1x32xf32>,
    %c4_i32_216 = arith.constant 4 : i32
    %292 = arith.addi %0, %c4_i32_216 : i32
    %293 = arith.index_cast %292 : i32 to index
    %c5_217 = arith.constant 5 : index
    %294 = memref.load %arg1[%293, %c5_217] : memref<8x8xi32, #tpu.memory_space<smem>>
    %295 = arith.index_cast %294 : i32 to index
    %c0_218 = arith.constant 0 : index
    %296 = vector.load %arg3[%295, %c0_218] : memref<128x32xf32, #tpu.memory_space<vmem>>, vector<1x32xf32>
    %c4_219 = arith.constant 4 : index
    %c0_220 = arith.constant 0 : index
    %297 = vector.load %arg5[%c4_219, %c0_220] : memref<8x32xf32, #tpu.memory_space<vmem>>, vector<1x32xf32>
    tpu.vector_store %arg5[%c4_219, %c0_220], %296 {strides = array<i32>} : memref<8x32xf32, #tpu.memory_space<vmem>>, vector<1x32xf32>,
    %c5_i32_221 = arith.constant 5 : i32
    %298 = arith.addi %0, %c5_i32_221 : i32
    %299 = arith.index_cast %298 : i32 to index
    %c5_222 = arith.constant 5 : index
    %300 = memref.load %arg1[%299, %c5_222] : memref<8x8xi32, #tpu.memory_space<smem>>
    %301 = arith.index_cast %300 : i32 to index
    %c0_223 = arith.constant 0 : index
    %302 = vector.load %arg3[%301, %c0_223] : memref<128x32xf32, #tpu.memory_space<vmem>>, vector<1x32xf32>
    %c5_224 = arith.constant 5 : index
    %c0_225 = arith.constant 0 : index
    %303 = vector.load %arg5[%c5_224, %c0_225] : memref<8x32xf32, #tpu.memory_space<vmem>>, vector<1x32xf32>
    tpu.vector_store %arg5[%c5_224, %c0_225], %302 {strides = array<i32>} : memref<8x32xf32, #tpu.memory_space<vmem>>, vector<1x32xf32>,
    %c6_i32_226 = arith.constant 6 : i32
    %304 = arith.addi %0, %c6_i32_226 : i32
    %305 = arith.index_cast %304 : i32 to index
    %c5_227 = arith.constant 5 : index
    %306 = memref.load %arg1[%305, %c5_227] : memref<8x8xi32, #tpu.memory_space<smem>>
    %307 = arith.index_cast %306 : i32 to index
    %c0_228 = arith.constant 0 : index
    %308 = vector.load %arg3[%307, %c0_228] : memref<128x32xf32, #tpu.memory_space<vmem>>, vector<1x32xf32>
    %c6_229 = arith.constant 6 : index
    %c0_230 = arith.constant 0 : index
    %309 = vector.load %arg5[%c6_229, %c0_230] : memref<8x32xf32, #tpu.memory_space<vmem>>, vector<1x32xf32>
    tpu.vector_store %arg5[%c6_229, %c0_230], %308 {strides = array<i32>} : memref<8x32xf32, #tpu.memory_space<vmem>>, vector<1x32xf32>,
    %c7_i32_231 = arith.constant 7 : i32
    %310 = arith.addi %0, %c7_i32_231 : i32
    %311 = arith.index_cast %310 : i32 to index
    %c5_232 = arith.constant 5 : index
    %312 = memref.load %arg1[%311, %c5_232] : memref<8x8xi32, #tpu.memory_space<smem>>
    %313 = arith.index_cast %312 : i32 to index
    %c0_233 = arith.constant 0 : index
    %314 = vector.load %arg3[%313, %c0_233] : memref<128x32xf32, #tpu.memory_space<vmem>>, vector<1x32xf32>
    %c7_234 = arith.constant 7 : index
    %c0_235 = arith.constant 0 : index
    %315 = vector.load %arg5[%c7_234, %c0_235] : memref<8x32xf32, #tpu.memory_space<vmem>>, vector<1x32xf32>
    tpu.vector_store %arg5[%c7_234, %c0_235], %314 {strides = array<i32>} : memref<8x32xf32, #tpu.memory_space<vmem>>, vector<1x32xf32>,
    %c0_236 = arith.constant 0 : index
    %c0_237 = arith.constant 0 : index
    %316 = vector.load %arg5[%c0_236, %c0_237] : memref<8x32xf32, #tpu.memory_space<vmem>>, vector<8x32xf32>
    %317 = vector.extract_strided_slice %1 {offsets = [0, 5], sizes = [8, 1], strides = [1, 1]} : vector<8x8xf32> to vector<8x1xf32>
    %318 = vector.broadcast %317 : vector<8x1xf32> to vector<8x32xf32>
    %319 = arith.mulf %316, %318 : vector<8x32xf32>
    %320 = arith.addf %267, %319 : vector<8x32xf32>
    %c0_i32_238 = arith.constant 0 : i32
    %321 = arith.addi %0, %c0_i32_238 : i32
    %322 = arith.index_cast %321 : i32 to index
    %c6_239 = arith.constant 6 : index
    %323 = memref.load %arg1[%322, %c6_239] : memref<8x8xi32, #tpu.memory_space<smem>>
    %324 = arith.index_cast %323 : i32 to index
    %c0_240 = arith.constant 0 : index
    %325 = vector.load %arg3[%324, %c0_240] : memref<128x32xf32, #tpu.memory_space<vmem>>, vector<1x32xf32>
    %c0_241 = arith.constant 0 : index
    %c0_242 = arith.constant 0 : index
    %326 = vector.load %arg5[%c0_241, %c0_242] : memref<8x32xf32, #tpu.memory_space<vmem>>, vector<1x32xf32>
    tpu.vector_store %arg5[%c0_241, %c0_242], %325 {strides = array<i32>} : memref<8x32xf32, #tpu.memory_space<vmem>>, vector<1x32xf32>,
    %c1_i32_243 = arith.constant 1 : i32
    %327 = arith.addi %0, %c1_i32_243 : i32
    %328 = arith.index_cast %327 : i32 to index
    %c6_244 = arith.constant 6 : index
    %329 = memref.load %arg1[%328, %c6_244] : memref<8x8xi32, #tpu.memory_space<smem>>
    %330 = arith.index_cast %329 : i32 to index
    %c0_245 = arith.constant 0 : index
    %331 = vector.load %arg3[%330, %c0_245] : memref<128x32xf32, #tpu.memory_space<vmem>>, vector<1x32xf32>
    %c1_246 = arith.constant 1 : index
    %c0_247 = arith.constant 0 : index
    %332 = vector.load %arg5[%c1_246, %c0_247] : memref<8x32xf32, #tpu.memory_space<vmem>>, vector<1x32xf32>
    tpu.vector_store %arg5[%c1_246, %c0_247], %331 {strides = array<i32>} : memref<8x32xf32, #tpu.memory_space<vmem>>, vector<1x32xf32>,
    %c2_i32_248 = arith.constant 2 : i32
    %333 = arith.addi %0, %c2_i32_248 : i32
    %334 = arith.index_cast %333 : i32 to index
    %c6_249 = arith.constant 6 : index
    %335 = memref.load %arg1[%334, %c6_249] : memref<8x8xi32, #tpu.memory_space<smem>>
    %336 = arith.index_cast %335 : i32 to index
    %c0_250 = arith.constant 0 : index
    %337 = vector.load %arg3[%336, %c0_250] : memref<128x32xf32, #tpu.memory_space<vmem>>, vector<1x32xf32>
    %c2_251 = arith.constant 2 : index
    %c0_252 = arith.constant 0 : index
    %338 = vector.load %arg5[%c2_251, %c0_252] : memref<8x32xf32, #tpu.memory_space<vmem>>, vector<1x32xf32>
    tpu.vector_store %arg5[%c2_251, %c0_252], %337 {strides = array<i32>} : memref<8x32xf32, #tpu.memory_space<vmem>>, vector<1x32xf32>,
    %c3_i32_253 = arith.constant 3 : i32
    %339 = arith.addi %0, %c3_i32_253 : i32
    %340 = arith.index_cast %339 : i32 to index
    %c6_254 = arith.constant 6 : index
    %341 = memref.load %arg1[%340, %c6_254] : memref<8x8xi32, #tpu.memory_space<smem>>
    %342 = arith.index_cast %341 : i32 to index
    %c0_255 = arith.constant 0 : index
    %343 = vector.load %arg3[%342, %c0_255] : memref<128x32xf32, #tpu.memory_space<vmem>>, vector<1x32xf32>
    %c3_256 = arith.constant 3 : index
    %c0_257 = arith.constant 0 : index
    %344 = vector.load %arg5[%c3_256, %c0_257] : memref<8x32xf32, #tpu.memory_space<vmem>>, vector<1x32xf32>
    tpu.vector_store %arg5[%c3_256, %c0_257], %343 {strides = array<i32>} : memref<8x32xf32, #tpu.memory_space<vmem>>, vector<1x32xf32>,
    %c4_i32_258 = arith.constant 4 : i32
    %345 = arith.addi %0, %c4_i32_258 : i32
    %346 = arith.index_cast %345 : i32 to index
    %c6_259 = arith.constant 6 : index
    %347 = memref.load %arg1[%346, %c6_259] : memref<8x8xi32, #tpu.memory_space<smem>>
    %348 = arith.index_cast %347 : i32 to index
    %c0_260 = arith.constant 0 : index
    %349 = vector.load %arg3[%348, %c0_260] : memref<128x32xf32, #tpu.memory_space<vmem>>, vector<1x32xf32>
    %c4_261 = arith.constant 4 : index
    %c0_262 = arith.constant 0 : index
    %350 = vector.load %arg5[%c4_261, %c0_262] : memref<8x32xf32, #tpu.memory_space<vmem>>, vector<1x32xf32>
    tpu.vector_store %arg5[%c4_261, %c0_262], %349 {strides = array<i32>} : memref<8x32xf32, #tpu.memory_space<vmem>>, vector<1x32xf32>,
    %c5_i32_263 = arith.constant 5 : i32
    %351 = arith.addi %0, %c5_i32_263 : i32
    %352 = arith.index_cast %351 : i32 to index
    %c6_264 = arith.constant 6 : index
    %353 = memref.load %arg1[%352, %c6_264] : memref<8x8xi32, #tpu.memory_space<smem>>
    %354 = arith.index_cast %353 : i32 to index
    %c0_265 = arith.constant 0 : index
    %355 = vector.load %arg3[%354, %c0_265] : memref<128x32xf32, #tpu.memory_space<vmem>>, vector<1x32xf32>
    %c5_266 = arith.constant 5 : index
    %c0_267 = arith.constant 0 : index
    %356 = vector.load %arg5[%c5_266, %c0_267] : memref<8x32xf32, #tpu.memory_space<vmem>>, vector<1x32xf32>
    tpu.vector_store %arg5[%c5_266, %c0_267], %355 {strides = array<i32>} : memref<8x32xf32, #tpu.memory_space<vmem>>, vector<1x32xf32>,
    %c6_i32_268 = arith.constant 6 : i32
    %357 = arith.addi %0, %c6_i32_268 : i32
    %358 = arith.index_cast %357 : i32 to index
    %c6_269 = arith.constant 6 : index
    %359 = memref.load %arg1[%358, %c6_269] : memref<8x8xi32, #tpu.memory_space<smem>>
    %360 = arith.index_cast %359 : i32 to index
    %c0_270 = arith.constant 0 : index
    %361 = vector.load %arg3[%360, %c0_270] : memref<128x32xf32, #tpu.memory_space<vmem>>, vector<1x32xf32>
    %c6_271 = arith.constant 6 : index
    %c0_272 = arith.constant 0 : index
    %362 = vector.load %arg5[%c6_271, %c0_272] : memref<8x32xf32, #tpu.memory_space<vmem>>, vector<1x32xf32>
    tpu.vector_store %arg5[%c6_271, %c0_272], %361 {strides = array<i32>} : memref<8x32xf32, #tpu.memory_space<vmem>>, vector<1x32xf32>,
    %c7_i32_273 = arith.constant 7 : i32
    %363 = arith.addi %0, %c7_i32_273 : i32
    %364 = arith.index_cast %363 : i32 to index
    %c6_274 = arith.constant 6 : index
    %365 = memref.load %arg1[%364, %c6_274] : memref<8x8xi32, #tpu.memory_space<smem>>
    %366 = arith.index_cast %365 : i32 to index
    %c0_275 = arith.constant 0 : index
    %367 = vector.load %arg3[%366, %c0_275] : memref<128x32xf32, #tpu.memory_space<vmem>>, vector<1x32xf32>
    %c7_276 = arith.constant 7 : index
    %c0_277 = arith.constant 0 : index
    %368 = vector.load %arg5[%c7_276, %c0_277] : memref<8x32xf32, #tpu.memory_space<vmem>>, vector<1x32xf32>
    tpu.vector_store %arg5[%c7_276, %c0_277], %367 {strides = array<i32>} : memref<8x32xf32, #tpu.memory_space<vmem>>, vector<1x32xf32>,
    %c0_278 = arith.constant 0 : index
    %c0_279 = arith.constant 0 : index
    %369 = vector.load %arg5[%c0_278, %c0_279] : memref<8x32xf32, #tpu.memory_space<vmem>>, vector<8x32xf32>
    %370 = vector.extract_strided_slice %1 {offsets = [0, 6], sizes = [8, 1], strides = [1, 1]} : vector<8x8xf32> to vector<8x1xf32>
    %371 = vector.broadcast %370 : vector<8x1xf32> to vector<8x32xf32>
    %372 = arith.mulf %369, %371 : vector<8x32xf32>
    %373 = arith.addf %320, %372 : vector<8x32xf32>
    %c0_i32_280 = arith.constant 0 : i32
    %374 = arith.addi %0, %c0_i32_280 : i32
    %375 = arith.index_cast %374 : i32 to index
    %c7_281 = arith.constant 7 : index
    %376 = memref.load %arg1[%375, %c7_281] : memref<8x8xi32, #tpu.memory_space<smem>>
    %377 = arith.index_cast %376 : i32 to index
    %c0_282 = arith.constant 0 : index
    %378 = vector.load %arg3[%377, %c0_282] : memref<128x32xf32, #tpu.memory_space<vmem>>, vector<1x32xf32>
    %c0_283 = arith.constant 0 : index
    %c0_284 = arith.constant 0 : index
    %379 = vector.load %arg5[%c0_283, %c0_284] : memref<8x32xf32, #tpu.memory_space<vmem>>, vector<1x32xf32>
    tpu.vector_store %arg5[%c0_283, %c0_284], %378 {strides = array<i32>} : memref<8x32xf32, #tpu.memory_space<vmem>>, vector<1x32xf32>,
    %c1_i32_285 = arith.constant 1 : i32
    %380 = arith.addi %0, %c1_i32_285 : i32
    %381 = arith.index_cast %380 : i32 to index
    %c7_286 = arith.constant 7 : index
    %382 = memref.load %arg1[%381, %c7_286] : memref<8x8xi32, #tpu.memory_space<smem>>
    %383 = arith.index_cast %382 : i32 to index
    %c0_287 = arith.constant 0 : index
    %384 = vector.load %arg3[%383, %c0_287] : memref<128x32xf32, #tpu.memory_space<vmem>>, vector<1x32xf32>
    %c1_288 = arith.constant 1 : index
    %c0_289 = arith.constant 0 : index
    %385 = vector.load %arg5[%c1_288, %c0_289] : memref<8x32xf32, #tpu.memory_space<vmem>>, vector<1x32xf32>
    tpu.vector_store %arg5[%c1_288, %c0_289], %384 {strides = array<i32>} : memref<8x32xf32, #tpu.memory_space<vmem>>, vector<1x32xf32>,
    %c2_i32_290 = arith.constant 2 : i32
    %386 = arith.addi %0, %c2_i32_290 : i32
    %387 = arith.index_cast %386 : i32 to index
    %c7_291 = arith.constant 7 : index
    %388 = memref.load %arg1[%387, %c7_291] : memref<8x8xi32, #tpu.memory_space<smem>>
    %389 = arith.index_cast %388 : i32 to index
    %c0_292 = arith.constant 0 : index
    %390 = vector.load %arg3[%389, %c0_292] : memref<128x32xf32, #tpu.memory_space<vmem>>, vector<1x32xf32>
    %c2_293 = arith.constant 2 : index
    %c0_294 = arith.constant 0 : index
    %391 = vector.load %arg5[%c2_293, %c0_294] : memref<8x32xf32, #tpu.memory_space<vmem>>, vector<1x32xf32>
    tpu.vector_store %arg5[%c2_293, %c0_294], %390 {strides = array<i32>} : memref<8x32xf32, #tpu.memory_space<vmem>>, vector<1x32xf32>,
    %c3_i32_295 = arith.constant 3 : i32
    %392 = arith.addi %0, %c3_i32_295 : i32
    %393 = arith.index_cast %392 : i32 to index
    %c7_296 = arith.constant 7 : index
    %394 = memref.load %arg1[%393, %c7_296] : memref<8x8xi32, #tpu.memory_space<smem>>
    %395 = arith.index_cast %394 : i32 to index
    %c0_297 = arith.constant 0 : index
    %396 = vector.load %arg3[%395, %c0_297] : memref<128x32xf32, #tpu.memory_space<vmem>>, vector<1x32xf32>
    %c3_298 = arith.constant 3 : index
    %c0_299 = arith.constant 0 : index
    %397 = vector.load %arg5[%c3_298, %c0_299] : memref<8x32xf32, #tpu.memory_space<vmem>>, vector<1x32xf32>
    tpu.vector_store %arg5[%c3_298, %c0_299], %396 {strides = array<i32>} : memref<8x32xf32, #tpu.memory_space<vmem>>, vector<1x32xf32>,
    %c4_i32_300 = arith.constant 4 : i32
    %398 = arith.addi %0, %c4_i32_300 : i32
    %399 = arith.index_cast %398 : i32 to index
    %c7_301 = arith.constant 7 : index
    %400 = memref.load %arg1[%399, %c7_301] : memref<8x8xi32, #tpu.memory_space<smem>>
    %401 = arith.index_cast %400 : i32 to index
    %c0_302 = arith.constant 0 : index
    %402 = vector.load %arg3[%401, %c0_302] : memref<128x32xf32, #tpu.memory_space<vmem>>, vector<1x32xf32>
    %c4_303 = arith.constant 4 : index
    %c0_304 = arith.constant 0 : index
    %403 = vector.load %arg5[%c4_303, %c0_304] : memref<8x32xf32, #tpu.memory_space<vmem>>, vector<1x32xf32>
    tpu.vector_store %arg5[%c4_303, %c0_304], %402 {strides = array<i32>} : memref<8x32xf32, #tpu.memory_space<vmem>>, vector<1x32xf32>,
    %c5_i32_305 = arith.constant 5 : i32
    %404 = arith.addi %0, %c5_i32_305 : i32
    %405 = arith.index_cast %404 : i32 to index
    %c7_306 = arith.constant 7 : index
    %406 = memref.load %arg1[%405, %c7_306] : memref<8x8xi32, #tpu.memory_space<smem>>
    %407 = arith.index_cast %406 : i32 to index
    %c0_307 = arith.constant 0 : index
    %408 = vector.load %arg3[%407, %c0_307] : memref<128x32xf32, #tpu.memory_space<vmem>>, vector<1x32xf32>
    %c5_308 = arith.constant 5 : index
    %c0_309 = arith.constant 0 : index
    %409 = vector.load %arg5[%c5_308, %c0_309] : memref<8x32xf32, #tpu.memory_space<vmem>>, vector<1x32xf32>
    tpu.vector_store %arg5[%c5_308, %c0_309], %408 {strides = array<i32>} : memref<8x32xf32, #tpu.memory_space<vmem>>, vector<1x32xf32>,
    %c6_i32_310 = arith.constant 6 : i32
    %410 = arith.addi %0, %c6_i32_310 : i32
    %411 = arith.index_cast %410 : i32 to index
    %c7_311 = arith.constant 7 : index
    %412 = memref.load %arg1[%411, %c7_311] : memref<8x8xi32, #tpu.memory_space<smem>>
    %413 = arith.index_cast %412 : i32 to index
    %c0_312 = arith.constant 0 : index
    %414 = vector.load %arg3[%413, %c0_312] : memref<128x32xf32, #tpu.memory_space<vmem>>, vector<1x32xf32>
    %c6_313 = arith.constant 6 : index
    %c0_314 = arith.constant 0 : index
    %415 = vector.load %arg5[%c6_313, %c0_314] : memref<8x32xf32, #tpu.memory_space<vmem>>, vector<1x32xf32>
    tpu.vector_store %arg5[%c6_313, %c0_314], %414 {strides = array<i32>} : memref<8x32xf32, #tpu.memory_space<vmem>>, vector<1x32xf32>,
    %c7_i32_315 = arith.constant 7 : i32
    %416 = arith.addi %0, %c7_i32_315 : i32
    %417 = arith.index_cast %416 : i32 to index
    %c7_316 = arith.constant 7 : index
    %418 = memref.load %arg1[%417, %c7_316] : memref<8x8xi32, #tpu.memory_space<smem>>
    %419 = arith.index_cast %418 : i32 to index
    %c0_317 = arith.constant 0 : index
    %420 = vector.load %arg3[%419, %c0_317] : memref<128x32xf32, #tpu.memory_space<vmem>>, vector<1x32xf32>
    %c7_318 = arith.constant 7 : index
    %c0_319 = arith.constant 0 : index
    %421 = vector.load %arg5[%c7_318, %c0_319] : memref<8x32xf32, #tpu.memory_space<vmem>>, vector<1x32xf32>
    tpu.vector_store %arg5[%c7_318, %c0_319], %420 {strides = array<i32>} : memref<8x32xf32, #tpu.memory_space<vmem>>, vector<1x32xf32>,
    %c0_320 = arith.constant 0 : index
    %c0_321 = arith.constant 0 : index
    %422 = vector.load %arg5[%c0_320, %c0_321] : memref<8x32xf32, #tpu.memory_space<vmem>>, vector<8x32xf32>
    %423 = vector.extract_strided_slice %1 {offsets = [0, 7], sizes = [8, 1], strides = [1, 1]} : vector<8x8xf32> to vector<8x1xf32>
    %424 = vector.broadcast %423 : vector<8x1xf32> to vector<8x32xf32>
    %425 = arith.mulf %422, %424 : vector<8x32xf32>
    %426 = arith.addf %373, %425 : vector<8x32xf32>
    %c0_322 = arith.constant 0 : index
    %c0_323 = arith.constant 0 : index
    %427 = vector.load %arg4[%c0_322, %c0_323] : memref<8x32xf32, #tpu.memory_space<vmem>>, vector<8x32xf32>
    tpu.vector_store %arg4[%c0_322, %c0_323], %426 {strides = array<i32>} : memref<8x32xf32, #tpu.memory_space<vmem>>, vector<8x32xf32>,
    return
  }
  func.func @transform_0(%arg0: i32, %arg1: memref<8x8xi32, #tpu.memory_space<smem>>) -> (i32, i32) {
    %c0_i32 = arith.constant 0 : i32
    %c0_i32_0 = arith.constant 0 : i32
    return %arg0, %c0_i32 : i32, i32
  }
  func.func @transform_1(%arg0: i32, %arg1: memref<8x8xi32, #tpu.memory_space<smem>>) -> (i32, i32) {
    %c0_i32 = arith.constant 0 : i32
    %c0_i32_0 = arith.constant 0 : i32
    %c0_i32_1 = arith.constant 0 : i32
    return %c0_i32, %c0_i32_0 : i32, i32
  }
  func.func @transform_2(%arg0: i32, %arg1: memref<8x8xi32, #tpu.memory_space<smem>>) -> (i32, i32) {
    %c0_i32 = arith.constant 0 : i32
    %c0_i32_0 = arith.constant 0 : i32
    return %arg0, %c0_i32 : i32, i32
  }
}

</mosaic_0001>

<llo_original>
// kernel: tpu_custom_call.1
$region0: #{tpu_custom_call.1}
  #allocation0 [shape = 'u32[]', space=smem, size = 0x4, offset = 0x4, fixed_abs, tag = 'smem constant byte address 0x4 - core index']
  #allocation1 [shape = 'u32[72,128]{1,0:T(1,128)}', space=vmem, size = 0x9000, scoped, tag = 'internal scratch']
  #allocation2 [shape = 'f32[8,32]{1,0:T(8,128)}', space=vmem, size = 0x1000, scoped, tag = 'scratch operand']
  #allocation3 [shape = 's32[1]{0}', space=sflag, size = 0x4, scoped, tag = 'scoped memory for tpu_custom_call.1']
  #allocation4 [shape = 'u8[4096]{0}', space=smem, size = 0x1000, scoped, tag = 'prefetched SMEM operand 0']
  %s0 = inlined_call_operand.vmem [shape: s32[8,8], index: 0, kind: input, shape index: {}]
  %s1 = inlined_call_operand.vmem [shape: f32[8,8], index: 1, kind: input, shape index: {}]
  %s2 = inlined_call_operand.vmem [shape: f32[128,32], index: 2, kind: input, shape index: {}]
  %s3 = inlined_call_operand.hbm [shape: f32[8,32], index: 3, kind: output, shape index: {}]
  %s4 = sld [smem:[#allocation0]]
  $region18: #{tpu_custom_call.1} parent=0
    _
  %s6 = ssub.s32 1, %s4
  %s7 = scalar_select 0, %s6, %s4
  %s9 = sshll.u32 %s0, 4
  %s10 = int_to_ptr.vmem [resolvable:$true] %s9
  %12 = dma.vmem_to_smem %s10, 128, [#allocation4], [#allocation3]
  %14 = dma.done [#allocation3], 128
  %15 = sfence
  $region1: #{tpu_custom_call.1} parent=0
    #allocation5 [shape = 'u8[4096]{0}', space=vmem, size = 0x1000, scoped, tag = 'output window, operand 0, single buffered']
    #allocation6 [shape = 's32[1]{0}', space=sflag, size = 0x4, scoped, tag = 'scoped memory for tpu_custom_call.1']
    %16 = vsyncpa [#allocation6], 0
    // Predicated region
    $region2: #{tpu_custom_call.1} parent=1 // pred_check
      _
    $region3: #{tpu_custom_call.1} parent=1 // pred_check_branch
      %18 = sbr.rel (0) target = $region5
    $region4: #{tpu_custom_call.1} parent=1 // pred_region
      _
    $region5: #{tpu_custom_call.1} parent=1 // pred_fallthru
      _
    // Predicated region
    $region6: #{tpu_custom_call.1} parent=1 // pred_check
      _
    $region7: #{tpu_custom_call.1} parent=1 // pred_check_branch
      %20 = sbr.rel (0) target = $region9
    $region8: #{tpu_custom_call.1} parent=1 // pred_region
      _
    $region9: #{tpu_custom_call.1} parent=1 // pred_fallthru
      _
    %s21 = smul.u32 0, 8
    %v22 = vld [vmem:[%s1] sm:$0xff]
    %s23 = smul.u32 %s21, 128
    %s24 = sld [smem:[#allocation4 + %s23]]
    %s25 = scalar_lea.vmem %s2, %s24
    %v26 = vld [vmem:[%s25] sm:$0x1]
    %vm27 = vcmask 253952
    %28 = vst.msk [vmem:[#allocation2] sm:$0x1] %vm27, %v26
    %s29 = sadd.s32 %s21, 1
    %s30 = smul.u32 %s29, 128
    %s31 = sld [smem:[#allocation4 + %s30]]
    %s32 = scalar_lea.vmem %s2, %s31
    %v33 = vld [vmem:[%s32] sm:$0x1]
    %34 = vst.msk [vmem:[#allocation2 + $0x1] sm:$0x1] %vm27, %v33
    %s35 = sadd.s32 %s21, 2
    %s36 = smul.u32 %s35, 128
    %s37 = sld [smem:[#allocation4 + %s36]]
    %s38 = scalar_lea.vmem %s2, %s37
    %v39 = vld [vmem:[%s38] sm:$0x1]
    %40 = vst.msk [vmem:[#allocation2 + $0x2] sm:$0x1] %vm27, %v39
    %s41 = sadd.s32 %s21, 3
    %s42 = smul.u32 %s41, 128
    %s43 = sld [smem:[#allocation4 + %s42]]
    %s44 = scalar_lea.vmem %s2, %s43
    %v45 = vld [vmem:[%s44] sm:$0x1]
    %46 = vst.msk [vmem:[#allocation2 + $0x3] sm:$0x1] %vm27, %v45
    %s47 = sadd.s32 %s21, 4
    %s48 = smul.u32 %s47, 128
    %s49 = sld [smem:[#allocation4 + %s48]]
    %s50 = scalar_lea.vmem %s2, %s49
    %v51 = vld [vmem:[%s50] sm:$0x1]
    %52 = vst.msk [vmem:[#allocation2 + $0x4] sm:$0x1] %vm27, %v51
    %s53 = sadd.s32 %s21, 5
    %s54 = smul.u32 %s53, 128
    %s55 = sld [smem:[#allocation4 + %s54]]
    %s56 = scalar_lea.vmem %s2, %s55
    %v57 = vld [vmem:[%s56] sm:$0x1]
    %58 = vst.msk [vmem:[#allocation2 + $0x5] sm:$0x1] %vm27, %v57
    %s59 = sadd.s32 %s21, 6
    %s60 = smul.u32 %s59, 128
    %s61 = sld [smem:[#allocation4 + %s60]]
    %s62 = scalar_lea.vmem %s2, %s61
    %v63 = vld [vmem:[%s62] sm:$0x1]
    %64 = vst.msk [vmem:[#allocation2 + $0x6] sm:$0x1] %vm27, %v63
    %s65 = sadd.s32 %s21, 7
    %s66 = smul.u32 %s65, 128
    %s67 = sld [smem:[#allocation4 + %s66]]
    %s68 = scalar_lea.vmem %s2, %s67
    %v69 = vld [vmem:[%s68] sm:$0x1]
    %70 = vst.msk [vmem:[#allocation2 + $0x7] sm:$0x1] %vm27, %v69
    %v71 = vld [vmem:[#allocation2] sm:$0xff]
    %73 = vset.pattern.permute.xlu0 0
    %74 = vperm.xlu0 %73, %v22
    %v75 = vpop.permute.xlu0 %74
    %v77 = vmul.f32 %v71, %v75
    %v78 = vadd.f32 %v77, 0.0
    %s79 = sadd.s32 %s23, 1
    %s80 = sld [smem:[#allocation4 + %s79]]
    %s81 = scalar_lea.vmem %s2, %s80
    %v82 = vld [vmem:[%s81] sm:$0x1]
    %83 = vst.msk [vmem:[#allocation2] sm:$0x1] %vm27, %v82
    %s84 = sadd.s32 %s30, 1
    %s85 = sld [smem:[#allocation4 + %s84]]
    %s86 = scalar_lea.vmem %s2, %s85
    %v87 = vld [vmem:[%s86] sm:$0x1]
    %88 = vst.msk [vmem:[#allocation2 + $0x1] sm:$0x1] %vm27, %v87
    %s89 = sadd.s32 %s36, 1
    %s90 = sld [smem:[#allocation4 + %s89]]
    %s91 = scalar_lea.vmem %s2, %s90
    %v92 = vld [vmem:[%s91] sm:$0x1]
    %93 = vst.msk [vmem:[#allocation2 + $0x2] sm:$0x1] %vm27, %v92
    %s94 = sadd.s32 %s42, 1
    %s95 = sld [smem:[#allocation4 + %s94]]
    %s96 = scalar_lea.vmem %s2, %s95
    %v97 = vld [vmem:[%s96] sm:$0x1]
    %98 = vst.msk [vmem:[#allocation2 + $0x3] sm:$0x1] %vm27, %v97
    %s99 = sadd.s32 %s48, 1
    %s100 = sld [smem:[#allocation4 + %s99]]
    %s101 = scalar_lea.vmem %s2, %s100
    %v102 = vld [vmem:[%s101] sm:$0x1]
    %103 = vst.msk [vmem:[#allocation2 + $0x4] sm:$0x1] %vm27, %v102
    %s104 = sadd.s32 %s54, 1
    %s105 = sld [smem:[#allocation4 + %s104]]
    %s106 = scalar_lea.vmem %s2, %s105
    %v107 = vld [vmem:[%s106] sm:$0x1]
    %108 = vst.msk [vmem:[#allocation2 + $0x5] sm:$0x1] %vm27, %v107
    %s109 = sadd.s32 %s60, 1
    %s110 = sld [smem:[#allocation4 + %s109]]
    %s111 = scalar_lea.vmem %s2, %s110
    %v112 = vld [vmem:[%s111] sm:$0x1]
    %113 = vst.msk [vmem:[#allocation2 + $0x6] sm:$0x1] %vm27, %v112
    %s114 = sadd.s32 %s66, 1
    %s115 = sld [smem:[#allocation4 + %s114]]
    %s116 = scalar_lea.vmem %s2, %s115
    %v117 = vld [vmem:[%s116] sm:$0x1]
    %118 = vst.msk [vmem:[#allocation2 + $0x7] sm:$0x1] %vm27, %v117
    %v119 = vld [vmem:[#allocation2] sm:$0xff]
    %120 = vset.pattern.permute.xlu0 1
    %121 = vperm.xlu0 %120, %v22
    %v122 = vpop.permute.xlu0 %121
    %v124 = vmul.f32 %v119, %v122
    %v125 = vadd.f32 %v78, %v124
    %s126 = sadd.s32 %s23, 2
    %s127 = sld [smem:[#allocation4 + %s126]]
    %s128 = scalar_lea.vmem %s2, %s127
    %v129 = vld [vmem:[%s128] sm:$0x1]
    %130 = vst.msk [vmem:[#allocation2] sm:$0x1] %vm27, %v129
    %s131 = sadd.s32 %s30, 2
    %s132 = sld [smem:[#allocation4 + %s131]]
    %s133 = scalar_lea.vmem %s2, %s132
    %v134 = vld [vmem:[%s133] sm:$0x1]
    %135 = vst.msk [vmem:[#allocation2 + $0x1] sm:$0x1] %vm27, %v134
    %s136 = sadd.s32 %s36, 2
    %s137 = sld [smem:[#allocation4 + %s136]]
    %s138 = scalar_lea.vmem %s2, %s137
    %v139 = vld [vmem:[%s138] sm:$0x1]
    %140 = vst.msk [vmem:[#allocation2 + $0x2] sm:$0x1] %vm27, %v139
    %s141 = sadd.s32 %s42, 2
    %s142 = sld [smem:[#allocation4 + %s141]]
    %s143 = scalar_lea.vmem %s2, %s142
    %v144 = vld [vmem:[%s143] sm:$0x1]
    %145 = vst.msk [vmem:[#allocation2 + $0x3] sm:$0x1] %vm27, %v144
    %s146 = sadd.s32 %s48, 2
    %s147 = sld [smem:[#allocation4 + %s146]]
    %s148 = scalar_lea.vmem %s2, %s147
    %v149 = vld [vmem:[%s148] sm:$0x1]
    %150 = vst.msk [vmem:[#allocation2 + $0x4] sm:$0x1] %vm27, %v149
    %s151 = sadd.s32 %s54, 2
    %s152 = sld [smem:[#allocation4 + %s151]]
    %s153 = scalar_lea.vmem %s2, %s152
    %v154 = vld [vmem:[%s153] sm:$0x1]
    %155 = vst.msk [vmem:[#allocation2 + $0x5] sm:$0x1] %vm27, %v154
    %s156 = sadd.s32 %s60, 2
    %s157 = sld [smem:[#allocation4 + %s156]]
    %s158 = scalar_lea.vmem %s2, %s157
    %v159 = vld [vmem:[%s158] sm:$0x1]
    %160 = vst.msk [vmem:[#allocation2 + $0x6] sm:$0x1] %vm27, %v159
    %s161 = sadd.s32 %s66, 2
    %s162 = sld [smem:[#allocation4 + %s161]]
    %s163 = scalar_lea.vmem %s2, %s162
    %v164 = vld [vmem:[%s163] sm:$0x1]
    %165 = vst.msk [vmem:[#allocation2 + $0x7] sm:$0x1] %vm27, %v164
    %v166 = vld [vmem:[#allocation2] sm:$0xff]
    %167 = vset.pattern.permute.xlu0 2
    %168 = vperm.xlu0 %167, %v22
    %v169 = vpop.permute.xlu0 %168
    %v171 = vmul.f32 %v166, %v169
    %v172 = vadd.f32 %v125, %v171
    %s173 = sadd.s32 %s23, 3
    %s174 = sld [smem:[#allocation4 + %s173]]
    %s175 = scalar_lea.vmem %s2, %s174
    %v176 = vld [vmem:[%s175] sm:$0x1]
    %177 = vst.msk [vmem:[#allocation2] sm:$0x1] %vm27, %v176
    %s178 = sadd.s32 %s30, 3
    %s179 = sld [smem:[#allocation4 + %s178]]
    %s180 = scalar_lea.vmem %s2, %s179
    %v181 = vld [vmem:[%s180] sm:$0x1]
    %182 = vst.msk [vmem:[#allocation2 + $0x1] sm:$0x1] %vm27, %v181
    %s183 = sadd.s32 %s36, 3
    %s184 = sld [smem:[#allocation4 + %s183]]
    %s185 = scalar_lea.vmem %s2, %s184
    %v186 = vld [vmem:[%s185] sm:$0x1]
    %187 = vst.msk [vmem:[#allocation2 + $0x2] sm:$0x1] %vm27, %v186
    %s188 = sadd.s32 %s42, 3
    %s189 = sld [smem:[#allocation4 + %s188]]
    %s190 = scalar_lea.vmem %s2, %s189
    %v191 = vld [vmem:[%s190] sm:$0x1]
    %192 = vst.msk [vmem:[#allocation2 + $0x3] sm:$0x1] %vm27, %v191
    %s193 = sadd.s32 %s48, 3
    %s194 = sld [smem:[#allocation4 + %s193]]
    %s195 = scalar_lea.vmem %s2, %s194
    %v196 = vld [vmem:[%s195] sm:$0x1]
    %197 = vst.msk [vmem:[#allocation2 + $0x4] sm:$0x1] %vm27, %v196
    %s198 = sadd.s32 %s54, 3
    %s199 = sld [smem:[#allocation4 + %s198]]
    %s200 = scalar_lea.vmem %s2, %s199
    %v201 = vld [vmem:[%s200] sm:$0x1]
    %202 = vst.msk [vmem:[#allocation2 + $0x5] sm:$0x1] %vm27, %v201
    %s203 = sadd.s32 %s60, 3
    %s204 = sld [smem:[#allocation4 + %s203]]
    %s205 = scalar_lea.vmem %s2, %s204
    %v206 = vld [vmem:[%s205] sm:$0x1]
    %207 = vst.msk [vmem:[#allocation2 + $0x6] sm:$0x1] %vm27, %v206
    %s208 = sadd.s32 %s66, 3
    %s209 = sld [smem:[#allocation4 + %s208]]
    %s210 = scalar_lea.vmem %s2, %s209
    %v211 = vld [vmem:[%s210] sm:$0x1]
    %212 = vst.msk [vmem:[#allocation2 + $0x7] sm:$0x1] %vm27, %v211
    %v213 = vld [vmem:[#allocation2] sm:$0xff]
    %214 = vset.pattern.permute.xlu0 3
    %215 = vperm.xlu0 %214, %v22
    %v216 = vpop.permute.xlu0 %215
    %v218 = vmul.f32 %v213, %v216
    %v219 = vadd.f32 %v172, %v218
    %s220 = sadd.s32 %s23, 4
    %s221 = sld [smem:[#allocation4 + %s220]]
    %s222 = scalar_lea.vmem %s2, %s221
    %v223 = vld [vmem:[%s222] sm:$0x1]
    %224 = vst.msk [vmem:[#allocation2] sm:$0x1] %vm27, %v223
    %s225 = sadd.s32 %s30, 4
    %s226 = sld [smem:[#allocation4 + %s225]]
    %s227 = scalar_lea.vmem %s2, %s226
    %v228 = vld [vmem:[%s227] sm:$0x1]
    %229 = vst.msk [vmem:[#allocation2 + $0x1] sm:$0x1] %vm27, %v228
    %s230 = sadd.s32 %s36, 4
    %s231 = sld [smem:[#allocation4 + %s230]]
    %s232 = scalar_lea.vmem %s2, %s231
    %v233 = vld [vmem:[%s232] sm:$0x1]
    %234 = vst.msk [vmem:[#allocation2 + $0x2] sm:$0x1] %vm27, %v233
    %s235 = sadd.s32 %s42, 4
    %s236 = sld [smem:[#allocation4 + %s235]]
    %s237 = scalar_lea.vmem %s2, %s236
    %v238 = vld [vmem:[%s237] sm:$0x1]
    %239 = vst.msk [vmem:[#allocation2 + $0x3] sm:$0x1] %vm27, %v238
    %s240 = sadd.s32 %s48, 4
    %s241 = sld [smem:[#allocation4 + %s240]]
    %s242 = scalar_lea.vmem %s2, %s241
    %v243 = vld [vmem:[%s242] sm:$0x1]
    %244 = vst.msk [vmem:[#allocation2 + $0x4] sm:$0x1] %vm27, %v243
    %s245 = sadd.s32 %s54, 4
    %s246 = sld [smem:[#allocation4 + %s245]]
    %s247 = scalar_lea.vmem %s2, %s246
    %v248 = vld [vmem:[%s247] sm:$0x1]
    %249 = vst.msk [vmem:[#allocation2 + $0x5] sm:$0x1] %vm27, %v248
    %s250 = sadd.s32 %s60, 4
    %s251 = sld [smem:[#allocation4 + %s250]]
    %s252 = scalar_lea.vmem %s2, %s251
    %v253 = vld [vmem:[%s252] sm:$0x1]
    %254 = vst.msk [vmem:[#allocation2 + $0x6] sm:$0x1] %vm27, %v253
    %s255 = sadd.s32 %s66, 4
    %s256 = sld [smem:[#allocation4 + %s255]]
    %s257 = scalar_lea.vmem %s2, %s256
    %v258 = vld [vmem:[%s257] sm:$0x1]
    %259 = vst.msk [vmem:[#allocation2 + $0x7] sm:$0x1] %vm27, %v258
    %v260 = vld [vmem:[#allocation2] sm:$0xff]
    %261 = vset.pattern.permute.xlu0 4
    %262 = vperm.xlu0 %261, %v22
    %v263 = vpop.permute.xlu0 %262
    %v265 = vmul.f32 %v260, %v263
    %v266 = vadd.f32 %v219, %v265
    %s267 = sadd.s32 %s23, 5
    %s268 = sld [smem:[#allocation4 + %s267]]
    %s269 = scalar_lea.vmem %s2, %s268
    %v270 = vld [vmem:[%s269] sm:$0x1]
    %271 = vst.msk [vmem:[#allocation2] sm:$0x1] %vm27, %v270
    %s272 = sadd.s32 %s30, 5
    %s273 = sld [smem:[#allocation4 + %s272]]
    %s274 = scalar_lea.vmem %s2, %s273
    %v275 = vld [vmem:[%s274] sm:$0x1]
    %276 = vst.msk [vmem:[#allocation2 + $0x1] sm:$0x1] %vm27, %v275
    %s277 = sadd.s32 %s36, 5
    %s278 = sld [smem:[#allocation4 + %s277]]
    %s279 = scalar_lea.vmem %s2, %s278
    %v280 = vld [vmem:[%s279] sm:$0x1]
    %281 = vst.msk [vmem:[#allocation2 + $0x2] sm:$0x1] %vm27, %v280
    %s282 = sadd.s32 %s42, 5
    %s283 = sld [smem:[#allocation4 + %s282]]
    %s284 = scalar_lea.vmem %s2, %s283
    %v285 = vld [vmem:[%s284] sm:$0x1]
    %286 = vst.msk [vmem:[#allocation2 + $0x3] sm:$0x1] %vm27, %v285
    %s287 = sadd.s32 %s48, 5
    %s288 = sld [smem:[#allocation4 + %s287]]
    %s289 = scalar_lea.vmem %s2, %s288
    %v290 = vld [vmem:[%s289] sm:$0x1]
    %291 = vst.msk [vmem:[#allocation2 + $0x4] sm:$0x1] %vm27, %v290
    %s292 = sadd.s32 %s54, 5
    %s293 = sld [smem:[#allocation4 + %s292]]
    %s294 = scalar_lea.vmem %s2, %s293
    %v295 = vld [vmem:[%s294] sm:$0x1]
    %296 = vst.msk [vmem:[#allocation2 + $0x5] sm:$0x1] %vm27, %v295
    %s297 = sadd.s32 %s60, 5
    %s298 = sld [smem:[#allocation4 + %s297]]
    %s299 = scalar_lea.vmem %s2, %s298
    %v300 = vld [vmem:[%s299] sm:$0x1]
    %301 = vst.msk [vmem:[#allocation2 + $0x6] sm:$0x1] %vm27, %v300
    %s302 = sadd.s32 %s66, 5
    %s303 = sld [smem:[#allocation4 + %s302]]
    %s304 = scalar_lea.vmem %s2, %s303
    %v305 = vld [vmem:[%s304] sm:$0x1]
    %306 = vst.msk [vmem:[#allocation2 + $0x7] sm:$0x1] %vm27, %v305
    %v307 = vld [vmem:[#allocation2] sm:$0xff]
    %308 = vset.pattern.permute.xlu0 5
    %309 = vperm.xlu0 %308, %v22
    %v310 = vpop.permute.xlu0 %309
    %v312 = vmul.f32 %v307, %v310
    %v313 = vadd.f32 %v266, %v312
    %s314 = sadd.s32 %s23, 6
    %s315 = sld [smem:[#allocation4 + %s314]]
    %s316 = scalar_lea.vmem %s2, %s315
    %v317 = vld [vmem:[%s316] sm:$0x1]
    %318 = vst.msk [vmem:[#allocation2] sm:$0x1] %vm27, %v317
    %s319 = sadd.s32 %s30, 6
    %s320 = sld [smem:[#allocation4 + %s319]]
    %s321 = scalar_lea.vmem %s2, %s320
    %v322 = vld [vmem:[%s321] sm:$0x1]
    %323 = vst.msk [vmem:[#allocation2 + $0x1] sm:$0x1] %vm27, %v322
    %s324 = sadd.s32 %s36, 6
    %s325 = sld [smem:[#allocation4 + %s324]]
    %s326 = scalar_lea.vmem %s2, %s325
    %v327 = vld [vmem:[%s326] sm:$0x1]
    %328 = vst.msk [vmem:[#allocation2 + $0x2] sm:$0x1] %vm27, %v327
    %s329 = sadd.s32 %s42, 6
    %s330 = sld [smem:[#allocation4 + %s329]]
    %s331 = scalar_lea.vmem %s2, %s330
    %v332 = vld [vmem:[%s331] sm:$0x1]
    %333 = vst.msk [vmem:[#allocation2 + $0x3] sm:$0x1] %vm27, %v332
    %s334 = sadd.s32 %s48, 6
    %s335 = sld [smem:[#allocation4 + %s334]]
    %s336 = scalar_lea.vmem %s2, %s335
    %v337 = vld [vmem:[%s336] sm:$0x1]
    %338 = vst.msk [vmem:[#allocation2 + $0x4] sm:$0x1] %vm27, %v337
    %s339 = sadd.s32 %s54, 6
    %s340 = sld [smem:[#allocation4 + %s339]]
    %s341 = scalar_lea.vmem %s2, %s340
    %v342 = vld [vmem:[%s341] sm:$0x1]
    %343 = vst.msk [vmem:[#allocation2 + $0x5] sm:$0x1] %vm27, %v342
    %s344 = sadd.s32 %s60, 6
    %s345 = sld [smem:[#allocation4 + %s344]]
    %s346 = scalar_lea.vmem %s2, %s345
    %v347 = vld [vmem:[%s346] sm:$0x1]
    %348 = vst.msk [vmem:[#allocation2 + $0x6] sm:$0x1] %vm27, %v347
    %s349 = sadd.s32 %s66, 6
    %s350 = sld [smem:[#allocation4 + %s349]]
    %s351 = scalar_lea.vmem %s2, %s350
    %v352 = vld [vmem:[%s351] sm:$0x1]
    %353 = vst.msk [vmem:[#allocation2 + $0x7] sm:$0x1] %vm27, %v352
    %v354 = vld [vmem:[#allocation2] sm:$0xff]
    %355 = vset.pattern.permute.xlu0 6
    %356 = vperm.xlu0 %355, %v22
    %v357 = vpop.permute.xlu0 %356
    %v359 = vmul.f32 %v354, %v357
    %v360 = vadd.f32 %v313, %v359
    %s361 = sadd.s32 %s23, 7
    %s362 = sld [smem:[#allocation4 + %s361]]
    %s363 = scalar_lea.vmem %s2, %s362
    %v364 = vld [vmem:[%s363] sm:$0x1]
    %365 = vst.msk [vmem:[#allocation2] sm:$0x1] %vm27, %v364
    %s366 = sadd.s32 %s30, 7
    %s367 = sld [smem:[#allocation4 + %s366]]
    %s368 = scalar_lea.vmem %s2, %s367
    %v369 = vld [vmem:[%s368] sm:$0x1]
    %370 = vst.msk [vmem:[#allocation2 + $0x1] sm:$0x1] %vm27, %v369
    %s371 = sadd.s32 %s36, 7
    %s372 = sld [smem:[#allocation4 + %s371]]
    %s373 = scalar_lea.vmem %s2, %s372
    %v374 = vld [vmem:[%s373] sm:$0x1]
    %375 = vst.msk [vmem:[#allocation2 + $0x2] sm:$0x1] %vm27, %v374
    %s376 = sadd.s32 %s42, 7
    %s377 = sld [smem:[#allocation4 + %s376]]
    %s378 = scalar_lea.vmem %s2, %s377
    %v379 = vld [vmem:[%s378] sm:$0x1]
    %380 = vst.msk [vmem:[#allocation2 + $0x3] sm:$0x1] %vm27, %v379
    %s381 = sadd.s32 %s48, 7
    %s382 = sld [smem:[#allocation4 + %s381]]
    %s383 = scalar_lea.vmem %s2, %s382
    %v384 = vld [vmem:[%s383] sm:$0x1]
    %385 = vst.msk [vmem:[#allocation2 + $0x4] sm:$0x1] %vm27, %v384
    %s386 = sadd.s32 %s54, 7
    %s387 = sld [smem:[#allocation4 + %s386]]
    %s388 = scalar_lea.vmem %s2, %s387
    %v389 = vld [vmem:[%s388] sm:$0x1]
    %390 = vst.msk [vmem:[#allocation2 + $0x5] sm:$0x1] %vm27, %v389
    %s391 = sadd.s32 %s60, 7
    %s392 = sld [smem:[#allocation4 + %s391]]
    %s393 = scalar_lea.vmem %s2, %s392
    %v394 = vld [vmem:[%s393] sm:$0x1]
    %395 = vst.msk [vmem:[#allocation2 + $0x6] sm:$0x1] %vm27, %v394
    %s396 = sadd.s32 %s66, 7
    %s397 = sld [smem:[#allocation4 + %s396]]
    %s398 = scalar_lea.vmem %s2, %s397
    %v399 = vld [vmem:[%s398] sm:$0x1]
    %400 = vst.msk [vmem:[#allocation2 + $0x7] sm:$0x1] %vm27, %v399
    %v401 = vld [vmem:[#allocation2] sm:$0xff]
    %402 = vset.pattern.permute.xlu0 7
    %403 = vperm.xlu0 %402, %v22
    %v404 = vpop.permute.xlu0 %403
    %v406 = vmul.f32 %v401, %v404
    %v407 = vadd.f32 %v360, %v406
    %vm408 = vcmask 261120
    %409 = vst.msk [vmem:[#allocation5] sm:$0xff] %vm408, %v407
    // Predicated region
    $region10: #{tpu_custom_call.1} parent=1 // pred_check
      _
    $region11: #{tpu_custom_call.1} parent=1 // pred_check_branch
      %411 = sbr.rel (0) target = $region13
    $region12: #{tpu_custom_call.1} parent=1 // pred_region
      %413 = vsyncadd [#allocation6], 0
      %s415 = sshll.u32 [#allocation5], 4
      %s416 = int_to_ptr.vmem [resolvable:$true] %s415
      %s417 = sshll.u32 %s3, 4
      %s418 = int_to_ptr.hbm [resolvable:$true] %s417
      %420 = dma.vmem_to_hbm [thread:$0]  %s416, 128, %s418, [#allocation6]
    $region13: #{tpu_custom_call.1} parent=1 // pred_fallthru
      _
    // Predicated region
    $region14: #{tpu_custom_call.1} parent=1 // pred_check
      _
    $region15: #{tpu_custom_call.1} parent=1 // pred_check_branch
      %422 = sbr.rel (0) target = $region17
    $region16: #{tpu_custom_call.1} parent=1 // pred_region
      %424 = dma.done [#allocation6], 128
    $region17: #{tpu_custom_call.1} parent=1 // pred_fallthru
      _
    %425 = vsyncpa [#allocation6], 1

</llo_original>
